<compile_context>
chip_gen: v7x
topology: tpu7x:2x2x1
jax: 0.10.0
libtpu: 0.0.40
codegen_flags: <defaults>
</compile_context>

<pallas_src>
import functools

import jax
import jax.numpy as jnp
from jax.experimental import pallas as pl
from jax.experimental.pallas import tpu as pltpu

LAYERS = [3, 60, 40, 40, 20, 20, 3]

# Deterministic stand-ins for the (undefined-in-snippet) global Pos_min/Pos_max.
POS_MIN = jnp.array([0.0, 0.0, 0.0], dtype=jnp.float32)   # shape (3,)
POS_MAX = jnp.array([1.0, 2.0, 3.0], dtype=jnp.float32)   # shape (3,)


def _dnn_kernel(x_ref, *refs, use_bf16):
    """Whole forward pass for one batch tile, fully in VMEM (feature-major).

    refs = (w0, b0, w1, b1, ..., w5, b5, out_ref).  Weights are (out, in),
    biases (out, 1); activations are (features, tile_b).  Input normalization
    is folded into (w0, b0) by the wrapper.
    """
    out_ref = refs[-1]
    wb = refs[:-1]
    n_layers = len(wb) // 2

    a = x_ref[...]                                        # (3, TB) f32

    # Layer 0 (K = 3): VPU broadcast-FMA instead of a nearly-empty MXU matmul.
    w0 = wb[0][...]                                       # (H0, 3)
    b0 = wb[1][...]                                       # (H0, 1)
    z = (b0
         + w0[:, 0:1] * a[0:1, :]
         + w0[:, 1:2] * a[1:2, :]
         + w0[:, 2:3] * a[2:3, :])                        # (H0, TB)
    a = jnp.tanh(z)

    def mm(w, act):
        if use_bf16:
            # bf16 MXU inputs, f32 accumulation (v5e/v6e/v7x MXU is bf16 native).
            return jnp.dot(w.astype(jnp.bfloat16), act.astype(jnp.bfloat16),
                           preferred_element_type=jnp.float32)
        return jnp.dot(w, act, preferred_element_type=jnp.float32)

    # Hidden layers 1 .. n-2: MXU matmul + bias + tanh (all lane-dense).
    for i in range(1, n_layers - 1):
        w = wb[2 * i][...]                                # (out, in)
        b = wb[2 * i + 1][...]                            # (out, 1)
        a = jnp.tanh(mm(w, a) + b)

    # Final layer: Linear only (no activation).
    # TODO(synk): the out=3 layer could also be done as 20 VPU FMAs to skip one
    # more MXU weight-load/drain; kept as a (cheap) matmul for simplicity.
    w = wb[-2][...]
    b = wb[-1][...]
    out_ref[...] = mm(w, a) + b                           # (3, TB) lane-dense store


def init_params(key, layers):
    """Xavier-normal weights (gain=1.0), zero biases.  Weights stored (out, in)."""
    params = []
    for i in range(len(layers) - 1):
        fan_in, fan_out = layers[i], layers[i + 1]
        key, sub = jax.random.split(key)
        std = (2.0 / (fan_in + fan_out)) ** 0.5
        w = std * jax.random.normal(sub, (fan_out, fan_in), dtype=jnp.float32)
        b = jnp.zeros((fan_out, 1), dtype=jnp.float32)
        params.append((w, b))
    return params


def fold_normalization(params, pos_min, pos_max):
    """Fold (x - min) / (max - min) into the first Linear layer.

    W0 @ ((x - min) * inv) + b0  ==  (W0 * inv_row) @ x + (b0 - (W0 * inv_row) @ min)
    """
    rng = pos_max - pos_min
    if bool(jnp.any(rng == 0)):
        raise ValueError("Pos_max must differ from Pos_min in every column.")
    inv = (1.0 / rng).reshape(1, -1)                      # (1, 3)
    w0, b0 = params[0]                                    # (H0, 3), (H0, 1)
    w0_f = w0 * inv                                       # scale input columns
    b0_f = b0 - w0_f @ pos_min.reshape(-1, 1)             # (H0, 1)
    return [(w0_f, b0_f)] + list(params[1:])


@functools.partial(jax.jit, static_argnames=("tile_b", "use_bf16"))
def dnn_forward(x, folded_params_flat, tile_b=512, use_bf16=False):
    """x: (N, 3) float32, any N.  Returns (N, 3) float32.

    folded_params_flat: flat [w0', b0', w1, b1, ...] with normalization folded
    into layer 0 (see fold_normalization).  Weights (out, in), biases (out, 1).
    tile_b must be a multiple of 128 (lane width); sweep 1024-2048 for large N,
    keep it small enough that the grid has >=2 steps (v7x has 2 TensorCores).
    """
    n, d_in = x.shape
    d_out = folded_params_flat[-2].shape[0]

    xt = x.T                                              # (3, N): batch on lanes
    grid = (pl.cdiv(n, tile_b),)                          # partial last block OK

    # x tiled over batch (lane axis); every weight/bias broadcast whole with a
    # constant index_map -> no re-DMA between grid steps.
    in_specs = [pl.BlockSpec((d_in, tile_b), lambda i: (0, i))]
    for p in folded_params_flat:
        in_specs.append(pl.BlockSpec(p.shape, lambda i: (0, 0)))
    out_spec = pl.BlockSpec((d_out, tile_b), lambda i: (0, i))

    # Advisory cost estimate for XLA's scheduler.
    flops = 2 * n * sum(LAYERS[i] * LAYERS[i + 1] for i in range(len(LAYERS) - 1))
    transcendentals = n * sum(LAYERS[1:-1])               # tanh per hidden unit
    weight_bytes = sum(int(p.size) * 4 for p in folded_params_flat)
    bytes_accessed = 4 * n * (d_in + d_out) + weight_bytes

    out_t = pl.pallas_call(
        functools.partial(_dnn_kernel, use_bf16=use_bf16),
        out_shape=jax.ShapeDtypeStruct((d_out, n), jnp.float32),
        grid_spec=pltpu.PrefetchScalarGridSpec(
            num_scalar_prefetch=0,
            grid=grid,
            in_specs=in_specs,
            out_specs=out_spec,
        ),
        compiler_params=pltpu.CompilerParams(
            dimension_semantics=("parallel",),
            vmem_limit_bytes=8 * 1024 * 1024,
        ),
        cost_estimate=pl.CostEstimate(
            flops=flops,
            transcendentals=transcendentals,
            bytes_accessed=bytes_accessed,
        ),
    )(xt, *folded_params_flat)

    return out_t.T                                        # back to (N, 3)


def dnn_forward_ref(x, params):
    """Pure-JAX reference of the original PyTorch forward (explicit normalize)."""
    a = (x - POS_MIN.reshape(1, -1)) / (POS_MAX - POS_MIN).reshape(1, -1)
    for (w, b) in params[:-1]:
        a = jnp.tanh(a @ w.T + b.T)
    w, b = params[-1]
    return a @ w.T + b.T


if __name__ == "__main__":
    key = jax.random.PRNGKey(0)
    key, kx = jax.random.split(key)

    # 1000 points: not a multiple of tile_b (exercises the clipped partial last
    # block) and gives a 2-step grid at tile_b=512 (both v7x TCs get work).
    n = 1000
    x = jax.random.uniform(kx, (n, 3), dtype=jnp.float32,
                           minval=0.0, maxval=1.0) * jnp.array([1.0, 2.0, 3.0],
                                                               dtype=jnp.float32)

    params = init_params(key, LAYERS)
    folded = fold_normalization(params, POS_MIN, POS_MAX)
    folded_flat = [t for wb in folded for t in wb]

    ref = dnn_forward_ref(x, params)

    # Exact (f32 MXU) path — matches PyTorch semantics.
    out = dnn_forward(x, folded_flat, tile_b=512, use_bf16=False)
    out = jax.block_until_ready(out)
    assert out.shape == (n, 3) and out.dtype == jnp.float32
    assert jnp.allclose(out, ref, atol=1e-4, rtol=1e-4), (
        float(jnp.max(jnp.abs(out - ref))))

    # Fast path for v6e/v7x (and optionally v5e): bf16 MXU inputs, f32 accumulate.
    out_bf16 = dnn_forward(x, folded_flat, tile_b=512, use_bf16=True)
    out_bf16 = jax.block_until_ready(out_bf16)
    assert jnp.allclose(out_bf16, ref, atol=3e-2, rtol=3e-2), (
        float(jnp.max(jnp.abs(out_bf16 - ref))))

    print("KERNEL_OK")
</pallas_src>

<mosaic_0001>
module attributes {stable_mosaic.version = 11 : i64} {
  func.func @_dnn_kernel(%arg0: i32, %arg1: memref<3x512xf32, #tpu.memory_space<vmem>>, %arg2: memref<60x3xf32, #tpu.memory_space<vmem>>, %arg3: memref<60x1xf32, #tpu.memory_space<vmem>>, %arg4: memref<40x60xf32, #tpu.memory_space<vmem>>, %arg5: memref<40x1xf32, #tpu.memory_space<vmem>>, %arg6: memref<40x40xf32, #tpu.memory_space<vmem>>, %arg7: memref<40x1xf32, #tpu.memory_space<vmem>>, %arg8: memref<20x40xf32, #tpu.memory_space<vmem>>, %arg9: memref<20x1xf32, #tpu.memory_space<vmem>>, %arg10: memref<20x20xf32, #tpu.memory_space<vmem>>, %arg11: memref<20x1xf32, #tpu.memory_space<vmem>>, %arg12: memref<3x20xf32, #tpu.memory_space<vmem>>, %arg13: memref<3x1xf32, #tpu.memory_space<vmem>>, %arg14: memref<3x512xf32, #tpu.memory_space<vmem>>) attributes {dimension_semantics = [#tpu.dimension_semantics<parallel>], iteration_bounds = array<i64: 2>, scalar_prefetch = 0 : i64, scratch_operands = 0 : i64, tpu.core_type = #tpu.core_type<tc>, window_params = [{transform_indices = @transform_0, window_bounds = array<i64: 3, 512>}, {pipeline_mode = #tpu.pipeline_mode<synchronous>, transform_indices = @transform_1, window_bounds = array<i64: 60, 3>}, {pipeline_mode = #tpu.pipeline_mode<synchronous>, transform_indices = @transform_2, window_bounds = array<i64: 60, 1>}, {pipeline_mode = #tpu.pipeline_mode<synchronous>, transform_indices = @transform_3, window_bounds = array<i64: 40, 60>}, {pipeline_mode = #tpu.pipeline_mode<synchronous>, transform_indices = @transform_4, window_bounds = array<i64: 40, 1>}, {pipeline_mode = #tpu.pipeline_mode<synchronous>, transform_indices = @transform_5, window_bounds = array<i64: 40, 40>}, {pipeline_mode = #tpu.pipeline_mode<synchronous>, transform_indices = @transform_6, window_bounds = array<i64: 40, 1>}, {pipeline_mode = #tpu.pipeline_mode<synchronous>, transform_indices = @transform_7, window_bounds = array<i64: 20, 40>}, {pipeline_mode = #tpu.pipeline_mode<synchronous>, transform_indices = @transform_8, window_bounds = array<i64: 20, 1>}, {pipeline_mode = #tpu.pipeline_mode<synchronous>, transform_indices = @transform_9, window_bounds = array<i64: 20, 20>}, {pipeline_mode = #tpu.pipeline_mode<synchronous>, transform_indices = @transform_10, window_bounds = array<i64: 20, 1>}, {pipeline_mode = #tpu.pipeline_mode<synchronous>, transform_indices = @transform_11, window_bounds = array<i64: 3, 20>}, {pipeline_mode = #tpu.pipeline_mode<synchronous>, transform_indices = @transform_12, window_bounds = array<i64: 3, 1>}, {transform_indices = @transform_13, window_bounds = array<i64: 3, 512>}]} {
    %c0 = arith.constant 0 : index
    %c0_0 = arith.constant 0 : index
    %0 = vector.load %arg1[%c0, %c0_0] : memref<3x512xf32, #tpu.memory_space<vmem>>, vector<3x512xf32>
    %c0_1 = arith.constant 0 : index
    %c0_2 = arith.constant 0 : index
    %1 = vector.load %arg2[%c0_1, %c0_2] : memref<60x3xf32, #tpu.memory_space<vmem>>, vector<60x3xf32>
    %c0_3 = arith.constant 0 : index
    %c0_4 = arith.constant 0 : index
    %2 = vector.load %arg3[%c0_3, %c0_4] : memref<60x1xf32, #tpu.memory_space<vmem>>, vector<60x1xf32>
    %3 = vector.extract_strided_slice %1 {offsets = [0, 0], sizes = [60, 1], strides = [1, 1]} : vector<60x3xf32> to vector<60x1xf32>
    %4 = vector.extract_strided_slice %0 {offsets = [0, 0], sizes = [1, 512], strides = [1, 1]} : vector<3x512xf32> to vector<1x512xf32>
    %5 = vector.broadcast %3 : vector<60x1xf32> to vector<60x512xf32>
    %6 = vector.broadcast %4 : vector<1x512xf32> to vector<60x512xf32>
    %7 = arith.mulf %5, %6 : vector<60x512xf32>
    %8 = vector.broadcast %2 : vector<60x1xf32> to vector<60x512xf32>
    %9 = arith.addf %8, %7 : vector<60x512xf32>
    %10 = vector.extract_strided_slice %1 {offsets = [0, 1], sizes = [60, 1], strides = [1, 1]} : vector<60x3xf32> to vector<60x1xf32>
    %11 = vector.extract_strided_slice %0 {offsets = [1, 0], sizes = [1, 512], strides = [1, 1]} : vector<3x512xf32> to vector<1x512xf32>
    %12 = vector.broadcast %10 : vector<60x1xf32> to vector<60x512xf32>
    %13 = vector.broadcast %11 : vector<1x512xf32> to vector<60x512xf32>
    %14 = arith.mulf %12, %13 : vector<60x512xf32>
    %15 = arith.addf %9, %14 : vector<60x512xf32>
    %16 = vector.extract_strided_slice %1 {offsets = [0, 2], sizes = [60, 1], strides = [1, 1]} : vector<60x3xf32> to vector<60x1xf32>
    %17 = vector.extract_strided_slice %0 {offsets = [2, 0], sizes = [1, 512], strides = [1, 1]} : vector<3x512xf32> to vector<1x512xf32>
    %18 = vector.broadcast %16 : vector<60x1xf32> to vector<60x512xf32>
    %19 = vector.broadcast %17 : vector<1x512xf32> to vector<60x512xf32>
    %20 = arith.mulf %18, %19 : vector<60x512xf32>
    %21 = arith.addf %15, %20 : vector<60x512xf32>
    %22 = math.tanh %21 : vector<60x512xf32>
    %c0_5 = arith.constant 0 : index
    %c0_6 = arith.constant 0 : index
    %23 = vector.load %arg4[%c0_5, %c0_6] : memref<40x60xf32, #tpu.memory_space<vmem>>, vector<40x60xf32>
    %c0_7 = arith.constant 0 : index
    %c0_8 = arith.constant 0 : index
    %24 = vector.load %arg5[%c0_7, %c0_8] : memref<40x1xf32, #tpu.memory_space<vmem>>, vector<40x1xf32>
    %cst = arith.constant dense<0.000000e+00> : vector<40x512xf32>
    %25 = tpu.matmul %23, %22, %cst {dimension_numbers = #tpu.dot_dimension_numbers<[1], [0], [0], [1], [0, 0, 1, 1], [], []>} : vector<40x60xf32>, vector<60x512xf32>, vector<40x512xf32> -> vector<40x512xf32>
    %26 = vector.broadcast %24 : vector<40x1xf32> to vector<40x512xf32>
    %27 = arith.addf %25, %26 : vector<40x512xf32>
    %28 = math.tanh %27 : vector<40x512xf32>
    %c0_9 = arith.constant 0 : index
    %c0_10 = arith.constant 0 : index
    %29 = vector.load %arg6[%c0_9, %c0_10] : memref<40x40xf32, #tpu.memory_space<vmem>>, vector<40x40xf32>
    %c0_11 = arith.constant 0 : index
    %c0_12 = arith.constant 0 : index
    %30 = vector.load %arg7[%c0_11, %c0_12] : memref<40x1xf32, #tpu.memory_space<vmem>>, vector<40x1xf32>
    %cst_13 = arith.constant dense<0.000000e+00> : vector<40x512xf32>
    %31 = tpu.matmul %29, %28, %cst_13 {dimension_numbers = #tpu.dot_dimension_numbers<[1], [0], [0], [1], [0, 0, 1, 1], [], []>} : vector<40x40xf32>, vector<40x512xf32>, vector<40x512xf32> -> vector<40x512xf32>
    %32 = vector.broadcast %30 : vector<40x1xf32> to vector<40x512xf32>
    %33 = arith.addf %31, %32 : vector<40x512xf32>
    %34 = math.tanh %33 : vector<40x512xf32>
    %c0_14 = arith.constant 0 : index
    %c0_15 = arith.constant 0 : index
    %35 = vector.load %arg8[%c0_14, %c0_15] : memref<20x40xf32, #tpu.memory_space<vmem>>, vector<20x40xf32>
    %c0_16 = arith.constant 0 : index
    %c0_17 = arith.constant 0 : index
    %36 = vector.load %arg9[%c0_16, %c0_17] : memref<20x1xf32, #tpu.memory_space<vmem>>, vector<20x1xf32>
    %cst_18 = arith.constant dense<0.000000e+00> : vector<20x512xf32>
    %37 = tpu.matmul %35, %34, %cst_18 {dimension_numbers = #tpu.dot_dimension_numbers<[1], [0], [0], [1], [0, 0, 1, 1], [], []>} : vector<20x40xf32>, vector<40x512xf32>, vector<20x512xf32> -> vector<20x512xf32>
    %38 = vector.broadcast %36 : vector<20x1xf32> to vector<20x512xf32>
    %39 = arith.addf %37, %38 : vector<20x512xf32>
    %40 = math.tanh %39 : vector<20x512xf32>
    %c0_19 = arith.constant 0 : index
    %c0_20 = arith.constant 0 : index
    %41 = vector.load %arg10[%c0_19, %c0_20] : memref<20x20xf32, #tpu.memory_space<vmem>>, vector<20x20xf32>
    %c0_21 = arith.constant 0 : index
    %c0_22 = arith.constant 0 : index
    %42 = vector.load %arg11[%c0_21, %c0_22] : memref<20x1xf32, #tpu.memory_space<vmem>>, vector<20x1xf32>
    %cst_23 = arith.constant dense<0.000000e+00> : vector<20x512xf32>
    %43 = tpu.matmul %41, %40, %cst_23 {dimension_numbers = #tpu.dot_dimension_numbers<[1], [0], [0], [1], [0, 0, 1, 1], [], []>} : vector<20x20xf32>, vector<20x512xf32>, vector<20x512xf32> -> vector<20x512xf32>
    %44 = vector.broadcast %42 : vector<20x1xf32> to vector<20x512xf32>
    %45 = arith.addf %43, %44 : vector<20x512xf32>
    %46 = math.tanh %45 : vector<20x512xf32>
    %c0_24 = arith.constant 0 : index
    %c0_25 = arith.constant 0 : index
    %47 = vector.load %arg12[%c0_24, %c0_25] : memref<3x20xf32, #tpu.memory_space<vmem>>, vector<3x20xf32>
    %c0_26 = arith.constant 0 : index
    %c0_27 = arith.constant 0 : index
    %48 = vector.load %arg13[%c0_26, %c0_27] : memref<3x1xf32, #tpu.memory_space<vmem>>, vector<3x1xf32>
    %cst_28 = arith.constant dense<0.000000e+00> : vector<3x512xf32>
    %49 = tpu.matmul %47, %46, %cst_28 {dimension_numbers = #tpu.dot_dimension_numbers<[1], [0], [0], [1], [0, 0, 1, 1], [], []>} : vector<3x20xf32>, vector<20x512xf32>, vector<3x512xf32> -> vector<3x512xf32>
    %50 = vector.broadcast %48 : vector<3x1xf32> to vector<3x512xf32>
    %51 = arith.addf %49, %50 : vector<3x512xf32>
    %c0_29 = arith.constant 0 : index
    %c0_30 = arith.constant 0 : index
    %52 = vector.load %arg14[%c0_29, %c0_30] : memref<3x512xf32, #tpu.memory_space<vmem>>, vector<3x512xf32>
    tpu.vector_store %arg14[%c0_29, %c0_30], %51 {strides = array<i32>} : memref<3x512xf32, #tpu.memory_space<vmem>>, vector<3x512xf32>,
    return
  }
  func.func @transform_0(%arg0: i32) -> (i32, i32) {
    %c0_i32 = arith.constant 0 : i32
    %c0_i32_0 = arith.constant 0 : i32
    return %c0_i32, %arg0 : i32, i32
  }
  func.func @transform_1(%arg0: i32) -> (i32, i32) {
    %c0_i32 = arith.constant 0 : i32
    %c0_i32_0 = arith.constant 0 : i32
    %c0_i32_1 = arith.constant 0 : i32
    return %c0_i32, %c0_i32_0 : i32, i32
  }
  func.func @transform_2(%arg0: i32) -> (i32, i32) {
    %c0_i32 = arith.constant 0 : i32
    %c0_i32_0 = arith.constant 0 : i32
    %c0_i32_1 = arith.constant 0 : i32
    return %c0_i32, %c0_i32_0 : i32, i32
  }
  func.func @transform_3(%arg0: i32) -> (i32, i32) {
    %c0_i32 = arith.constant 0 : i32
    %c0_i32_0 = arith.constant 0 : i32
    %c0_i32_1 = arith.constant 0 : i32
    return %c0_i32, %c0_i32_0 : i32, i32
  }
  func.func @transform_4(%arg0: i32) -> (i32, i32) {
    %c0_i32 = arith.constant 0 : i32
    %c0_i32_0 = arith.constant 0 : i32
    %c0_i32_1 = arith.constant 0 : i32
    return %c0_i32, %c0_i32_0 : i32, i32
  }
  func.func @transform_5(%arg0: i32) -> (i32, i32) {
    %c0_i32 = arith.constant 0 : i32
    %c0_i32_0 = arith.constant 0 : i32
    %c0_i32_1 = arith.constant 0 : i32
    return %c0_i32, %c0_i32_0 : i32, i32
  }
  func.func @transform_6(%arg0: i32) -> (i32, i32) {
    %c0_i32 = arith.constant 0 : i32
    %c0_i32_0 = arith.constant 0 : i32
    %c0_i32_1 = arith.constant 0 : i32
    return %c0_i32, %c0_i32_0 : i32, i32
  }
  func.func @transform_7(%arg0: i32) -> (i32, i32) {
    %c0_i32 = arith.constant 0 : i32
    %c0_i32_0 = arith.constant 0 : i32
    %c0_i32_1 = arith.constant 0 : i32
    return %c0_i32, %c0_i32_0 : i32, i32
  }
  func.func @transform_8(%arg0: i32) -> (i32, i32) {
    %c0_i32 = arith.constant 0 : i32
    %c0_i32_0 = arith.constant 0 : i32
    %c0_i32_1 = arith.constant 0 : i32
    return %c0_i32, %c0_i32_0 : i32, i32
  }
  func.func @transform_9(%arg0: i32) -> (i32, i32) {
    %c0_i32 = arith.constant 0 : i32
    %c0_i32_0 = arith.constant 0 : i32
    %c0_i32_1 = arith.constant 0 : i32
    return %c0_i32, %c0_i32_0 : i32, i32
  }
  func.func @transform_10(%arg0: i32) -> (i32, i32) {
    %c0_i32 = arith.constant 0 : i32
    %c0_i32_0 = arith.constant 0 : i32
    %c0_i32_1 = arith.constant 0 : i32
    return %c0_i32, %c0_i32_0 : i32, i32
  }
  func.func @transform_11(%arg0: i32) -> (i32, i32) {
    %c0_i32 = arith.constant 0 : i32
    %c0_i32_0 = arith.constant 0 : i32
    %c0_i32_1 = arith.constant 0 : i32
    return %c0_i32, %c0_i32_0 : i32, i32
  }
  func.func @transform_12(%arg0: i32) -> (i32, i32) {
    %c0_i32 = arith.constant 0 : i32
    %c0_i32_0 = arith.constant 0 : i32
    %c0_i32_1 = arith.constant 0 : i32
    return %c0_i32, %c0_i32_0 : i32, i32
  }
  func.func @transform_13(%arg0: i32) -> (i32, i32) {
    %c0_i32 = arith.constant 0 : i32
    %c0_i32_0 = arith.constant 0 : i32
    return %c0_i32, %arg0 : i32, i32
  }
}

</mosaic_0001>

<llo_original>
// kernel: dnn_forward.1
$region0: #{dnn_forward.1}
  #allocation0 [shape = 'u32[]', space=smem, size = 0x4, offset = 0x4, fixed_abs, tag = 'smem constant byte address 0x4 - core index']
  #allocation1 [shape = 'u32[144,128]{1,0:T(1,128)}', space=vmem, size = 0x12000, scoped, tag = 'internal scratch']
  %s0 = inlined_call_operand.vmem [shape: f32[3,1000], index: 0, kind: input, shape index: {}]
  %s1 = inlined_call_operand.vmem [shape: f32[60,3], index: 1, kind: input, shape index: {}]
  %s2 = inlined_call_operand.vmem [shape: f32[60,1], index: 2, kind: input, shape index: {}]
  %s3 = inlined_call_operand.vmem [shape: f32[40,60], index: 3, kind: input, shape index: {}]
  %s4 = inlined_call_operand.vmem [shape: f32[40,1], index: 4, kind: input, shape index: {}]
  %s5 = inlined_call_operand.vmem [shape: f32[40,40], index: 5, kind: input, shape index: {}]
  %s6 = inlined_call_operand.vmem [shape: f32[40,1], index: 6, kind: input, shape index: {}]
  %s7 = inlined_call_operand.vmem [shape: f32[20,40], index: 7, kind: input, shape index: {}]
  %s8 = inlined_call_operand.vmem [shape: f32[20,1], index: 8, kind: input, shape index: {}]
  %s9 = inlined_call_operand.vmem [shape: f32[20,20], index: 9, kind: input, shape index: {}]
  %s10 = inlined_call_operand.vmem [shape: f32[20,1], index: 10, kind: input, shape index: {}]
  %s11 = inlined_call_operand.vmem [shape: f32[3,20], index: 11, kind: input, shape index: {}]
  %s12 = inlined_call_operand.vmem [shape: f32[3,1], index: 12, kind: input, shape index: {}]
  %s13 = inlined_call_operand.hbm [shape: f32[3,1000], index: 13, kind: output, shape index: {}]
  %s14 = sld [smem:[#allocation0]]
  $region85: #{dnn_forward.1} parent=0
    _
  %s16 = ssub.s32 1, %s14
  %s17 = scalar_select 0, %s16, %s14
  $region1: #{dnn_forward.1} parent=0
    #allocation2 [shape = 'u8[16384]{0}', space=vmem, size = 0x4000, scoped, tag = 'output window, operand 0']
    #allocation3 [shape = 's32[2]{0}', space=sflag, size = 0x8, scoped, tag = 'scoped memory for dnn_forward.1']
    %18 = vsyncpa [#allocation3], 0
    %s19 = scalar_lea.sflag [#allocation3], 1
    %20 = vsyncpa %s19, 0
    loop: start=0, step=1, limit=4
    $region2: #{dnn_forward.1} parent=1 // loop_pre_header
      _
    $region3: #{dnn_forward.1} parent=1 // loop_header
      %s22 = sphi 0, %s26
      %p23 = scmp.ge.s32.totalorder %s22, 4
      %s32 = sphi 0, %s34
      %s35 = sphi 0, %s32
      %s36 = sphi 0, %s35
      %s52 = sphi 0, %s36
      %s56 = sphi 0, %s56
      %s58 = sphi 0, %s56
      %s59 = sphi 0, %s58
      %s73 = sphi 0, %s59
      %s77 = sphi 0, %s77
      %s79 = sphi 0, %s77
      %s80 = sphi 0, %s79
      %s94 = sphi 0, %s80
      %s98 = sphi 0, %s98
      %s100 = sphi 0, %s98
      %s101 = sphi 0, %s100
      %s115 = sphi 0, %s101
      %s119 = sphi 0, %s119
      %s121 = sphi 0, %s119
      %s122 = sphi 0, %s121
      %s136 = sphi 0, %s122
      %s140 = sphi 0, %s140
      %s142 = sphi 0, %s140
      %s143 = sphi 0, %s142
      %s157 = sphi 0, %s143
      %s161 = sphi 0, %s161
      %s163 = sphi 0, %s161
      %s164 = sphi 0, %s163
      %s178 = sphi 0, %s164
      %s182 = sphi 0, %s182
      %s184 = sphi 0, %s182
      %s185 = sphi 0, %s184
      %s199 = sphi 0, %s185
      %s203 = sphi 0, %s203
      %s205 = sphi 0, %s203
      %s206 = sphi 0, %s205
      %s220 = sphi 0, %s206
      %s224 = sphi 0, %s224
      %s226 = sphi 0, %s224
      %s227 = sphi 0, %s226
      %s241 = sphi 0, %s227
      %s245 = sphi 0, %s245
      %s247 = sphi 0, %s245
      %s248 = sphi 0, %s247
      %s262 = sphi 0, %s248
      %s266 = sphi 0, %s266
      %s268 = sphi 0, %s266
      %s269 = sphi 0, %s268
      %s283 = sphi 0, %s269
      %s287 = sphi 0, %s287
      %s289 = sphi 0, %s287
      %s290 = sphi 0, %s289
      %s304 = sphi 0, %s290
      %s310 = sphi 0, %s312
      %s313 = sphi 0, %s310
      %s314 = sphi 0, %s313
      %s330 = sphi 0, %s314
    $region4: #{dnn_forward.1} parent=1 // loop_header_branch
      %25 = sbr.rel (%p23) target = $region8
    $region5: #{dnn_forward.1} parent=1 // loop_body
      %s27 = ssub.s32 %s22, 1
      %s28 = ssub.s32 %s22, 2
      %s29 = sadd.s32 %s22, 1
      %s30 = ssub.s32 %s22, %s29
      %p31 = scmp.eq.s32.totalorder %s30, 0
      %s33 = sadd.s32 %s32, 1
      %s34 = scalar_select %p31, %s32, %s33
      %p37 = pneg %p31
      %p38 = scmp.eq.s32.totalorder %s22, 1
      %p39 = por %p37, %p38
      %p40 = scmp.ne.s32.totalorder %s32, %s35
      %p41 = scmp.eq.s32.totalorder %s22, 0
      %p42 = por %p40, %p41
      %p43 = scmp.ne.s32.totalorder %s32, %s35
      %p44 = scmp.eq.s32.totalorder %s27, 1
      %p45 = por %p43, %p44
      %p46 = scmp.ne.s32.totalorder %s35, %s36
      %p47 = scmp.eq.s32.totalorder %s27, 0
      %p48 = por %p46, %p47
      %p49 = scmp.ne.s32.totalorder %s35, %s36
      %p50 = scmp.eq.s32.totalorder %s28, 1
      %p51 = por %p49, %p50
      %p53 = scmp.ne.s32.totalorder %s36, %s52
      %p54 = scmp.eq.s32.totalorder %s28, 0
      %p55 = por %p53, %p54
      %s57 = sadd.s32 %s56, 1
      %p60 = scmp.eq.s32.totalorder %s22, 1
      %p61 = scmp.ne.s32.totalorder %s56, %s58
      %p62 = scmp.eq.s32.totalorder %s22, 0
      %p63 = por %p61, %p62
      %p64 = scmp.ne.s32.totalorder %s56, %s58
      %p65 = scmp.eq.s32.totalorder %s27, 1
      %p66 = por %p64, %p65
      %p67 = scmp.ne.s32.totalorder %s58, %s59
      %p68 = scmp.eq.s32.totalorder %s27, 0
      %p69 = por %p67, %p68
      %p70 = scmp.ne.s32.totalorder %s58, %s59
      %p71 = scmp.eq.s32.totalorder %s28, 1
      %p72 = por %p70, %p71
      %p74 = scmp.ne.s32.totalorder %s59, %s73
      %p75 = scmp.eq.s32.totalorder %s28, 0
      %p76 = por %p74, %p75
      %s78 = sadd.s32 %s77, 1
      %p81 = scmp.eq.s32.totalorder %s22, 1
      %p82 = scmp.ne.s32.totalorder %s77, %s79
      %p83 = scmp.eq.s32.totalorder %s22, 0
      %p84 = por %p82, %p83
      %p85 = scmp.ne.s32.totalorder %s77, %s79
      %p86 = scmp.eq.s32.totalorder %s27, 1
      %p87 = por %p85, %p86
      %p88 = scmp.ne.s32.totalorder %s79, %s80
      %p89 = scmp.eq.s32.totalorder %s27, 0
      %p90 = por %p88, %p89
      %p91 = scmp.ne.s32.totalorder %s79, %s80
      %p92 = scmp.eq.s32.totalorder %s28, 1
      %p93 = por %p91, %p92
      %p95 = scmp.ne.s32.totalorder %s80, %s94
      %p96 = scmp.eq.s32.totalorder %s28, 0
      %p97 = por %p95, %p96
      %s99 = sadd.s32 %s98, 1
      %p102 = scmp.eq.s32.totalorder %s22, 1
      %p103 = scmp.ne.s32.totalorder %s98, %s100
      %p104 = scmp.eq.s32.totalorder %s22, 0
      %p105 = por %p103, %p104
      %p106 = scmp.ne.s32.totalorder %s98, %s100
      %p107 = scmp.eq.s32.totalorder %s27, 1
      %p108 = por %p106, %p107
      %p109 = scmp.ne.s32.totalorder %s100, %s101
      %p110 = scmp.eq.s32.totalorder %s27, 0
      %p111 = por %p109, %p110
      %p112 = scmp.ne.s32.totalorder %s100, %s101
      %p113 = scmp.eq.s32.totalorder %s28, 1
      %p114 = por %p112, %p113
      %p116 = scmp.ne.s32.totalorder %s101, %s115
      %p117 = scmp.eq.s32.totalorder %s28, 0
      %p118 = por %p116, %p117
      %s120 = sadd.s32 %s119, 1
      %p123 = scmp.eq.s32.totalorder %s22, 1
      %p124 = scmp.ne.s32.totalorder %s119, %s121
      %p125 = scmp.eq.s32.totalorder %s22, 0
      %p126 = por %p124, %p125
      %p127 = scmp.ne.s32.totalorder %s119, %s121
      %p128 = scmp.eq.s32.totalorder %s27, 1
      %p129 = por %p127, %p128
      %p130 = scmp.ne.s32.totalorder %s121, %s122
      %p131 = scmp.eq.s32.totalorder %s27, 0
      %p132 = por %p130, %p131
      %p133 = scmp.ne.s32.totalorder %s121, %s122
      %p134 = scmp.eq.s32.totalorder %s28, 1
      %p135 = por %p133, %p134
      %p137 = scmp.ne.s32.totalorder %s122, %s136
      %p138 = scmp.eq.s32.totalorder %s28, 0
      %p139 = por %p137, %p138
      %s141 = sadd.s32 %s140, 1
      %p144 = scmp.eq.s32.totalorder %s22, 1
      %p145 = scmp.ne.s32.totalorder %s140, %s142
      %p146 = scmp.eq.s32.totalorder %s22, 0
      %p147 = por %p145, %p146
      %p148 = scmp.ne.s32.totalorder %s140, %s142
      %p149 = scmp.eq.s32.totalorder %s27, 1
      %p150 = por %p148, %p149
      %p151 = scmp.ne.s32.totalorder %s142, %s143
      %p152 = scmp.eq.s32.totalorder %s27, 0
      %p153 = por %p151, %p152
      %p154 = scmp.ne.s32.totalorder %s142, %s143
      %p155 = scmp.eq.s32.totalorder %s28, 1
      %p156 = por %p154, %p155
      %p158 = scmp.ne.s32.totalorder %s143, %s157
      %p159 = scmp.eq.s32.totalorder %s28, 0
      %p160 = por %p158, %p159
      %s162 = sadd.s32 %s161, 1
      %p165 = scmp.eq.s32.totalorder %s22, 1
      %p166 = scmp.ne.s32.totalorder %s161, %s163
      %p167 = scmp.eq.s32.totalorder %s22, 0
      %p168 = por %p166, %p167
      %p169 = scmp.ne.s32.totalorder %s161, %s163
      %p170 = scmp.eq.s32.totalorder %s27, 1
      %p171 = por %p169, %p170
      %p172 = scmp.ne.s32.totalorder %s163, %s164
      %p173 = scmp.eq.s32.totalorder %s27, 0
      %p174 = por %p172, %p173
      %p175 = scmp.ne.s32.totalorder %s163, %s164
      %p176 = scmp.eq.s32.totalorder %s28, 1
      %p177 = por %p175, %p176
      %p179 = scmp.ne.s32.totalorder %s164, %s178
      %p180 = scmp.eq.s32.totalorder %s28, 0
      %p181 = por %p179, %p180
      %s183 = sadd.s32 %s182, 1
      %p186 = scmp.eq.s32.totalorder %s22, 1
      %p187 = scmp.ne.s32.totalorder %s182, %s184
      %p188 = scmp.eq.s32.totalorder %s22, 0
      %p189 = por %p187, %p188
      %p190 = scmp.ne.s32.totalorder %s182, %s184
      %p191 = scmp.eq.s32.totalorder %s27, 1
      %p192 = por %p190, %p191
      %p193 = scmp.ne.s32.totalorder %s184, %s185
      %p194 = scmp.eq.s32.totalorder %s27, 0
      %p195 = por %p193, %p194
      %p196 = scmp.ne.s32.totalorder %s184, %s185
      %p197 = scmp.eq.s32.totalorder %s28, 1
      %p198 = por %p196, %p197
      %p200 = scmp.ne.s32.totalorder %s185, %s199
      %p201 = scmp.eq.s32.totalorder %s28, 0
      %p202 = por %p200, %p201
      %s204 = sadd.s32 %s203, 1
      %p207 = scmp.eq.s32.totalorder %s22, 1
      %p208 = scmp.ne.s32.totalorder %s203, %s205
      %p209 = scmp.eq.s32.totalorder %s22, 0
      %p210 = por %p208, %p209
      %p211 = scmp.ne.s32.totalorder %s203, %s205
      %p212 = scmp.eq.s32.totalorder %s27, 1
      %p213 = por %p211, %p212
      %p214 = scmp.ne.s32.totalorder %s205, %s206
      %p215 = scmp.eq.s32.totalorder %s27, 0
      %p216 = por %p214, %p215
      %p217 = scmp.ne.s32.totalorder %s205, %s206
      %p218 = scmp.eq.s32.totalorder %s28, 1
      %p219 = por %p217, %p218
      %p221 = scmp.ne.s32.totalorder %s206, %s220
      %p222 = scmp.eq.s32.totalorder %s28, 0
      %p223 = por %p221, %p222
      %s225 = sadd.s32 %s224, 1
      %p228 = scmp.eq.s32.totalorder %s22, 1
      %p229 = scmp.ne.s32.totalorder %s224, %s226
      %p230 = scmp.eq.s32.totalorder %s22, 0
      %p231 = por %p229, %p230
      %p232 = scmp.ne.s32.totalorder %s224, %s226
      %p233 = scmp.eq.s32.totalorder %s27, 1
      %p234 = por %p232, %p233
      %p235 = scmp.ne.s32.totalorder %s226, %s227
      %p236 = scmp.eq.s32.totalorder %s27, 0
      %p237 = por %p235, %p236
      %p238 = scmp.ne.s32.totalorder %s226, %s227
      %p239 = scmp.eq.s32.totalorder %s28, 1
      %p240 = por %p238, %p239
      %p242 = scmp.ne.s32.totalorder %s227, %s241
      %p243 = scmp.eq.s32.totalorder %s28, 0
      %p244 = por %p242, %p243
      %s246 = sadd.s32 %s245, 1
      %p249 = scmp.eq.s32.totalorder %s22, 1
      %p250 = scmp.ne.s32.totalorder %s245, %s247
      %p251 = scmp.eq.s32.totalorder %s22, 0
      %p252 = por %p250, %p251
      %p253 = scmp.ne.s32.totalorder %s245, %s247
      %p254 = scmp.eq.s32.totalorder %s27, 1
      %p255 = por %p253, %p254
      %p256 = scmp.ne.s32.totalorder %s247, %s248
      %p257 = scmp.eq.s32.totalorder %s27, 0
      %p258 = por %p256, %p257
      %p259 = scmp.ne.s32.totalorder %s247, %s248
      %p260 = scmp.eq.s32.totalorder %s28, 1
      %p261 = por %p259, %p260
      %p263 = scmp.ne.s32.totalorder %s248, %s262
      %p264 = scmp.eq.s32.totalorder %s28, 0
      %p265 = por %p263, %p264
      %s267 = sadd.s32 %s266, 1
      %p270 = scmp.eq.s32.totalorder %s22, 1
      %p271 = scmp.ne.s32.totalorder %s266, %s268
      %p272 = scmp.eq.s32.totalorder %s22, 0
      %p273 = por %p271, %p272
      %p274 = scmp.ne.s32.totalorder %s266, %s268
      %p275 = scmp.eq.s32.totalorder %s27, 1
      %p276 = por %p274, %p275
      %p277 = scmp.ne.s32.totalorder %s268, %s269
      %p278 = scmp.eq.s32.totalorder %s27, 0
      %p279 = por %p277, %p278
      %p280 = scmp.ne.s32.totalorder %s268, %s269
      %p281 = scmp.eq.s32.totalorder %s28, 1
      %p282 = por %p280, %p281
      %p284 = scmp.ne.s32.totalorder %s269, %s283
      %p285 = scmp.eq.s32.totalorder %s28, 0
      %p286 = por %p284, %p285
      %s288 = sadd.s32 %s287, 1
      %p291 = scmp.eq.s32.totalorder %s22, 1
      %p292 = scmp.ne.s32.totalorder %s287, %s289
      %p293 = scmp.eq.s32.totalorder %s22, 0
      %p294 = por %p292, %p293
      %p295 = scmp.ne.s32.totalorder %s287, %s289
      %p296 = scmp.eq.s32.totalorder %s27, 1
      %p297 = por %p295, %p296
      %p298 = scmp.ne.s32.totalorder %s289, %s290
      %p299 = scmp.eq.s32.totalorder %s27, 0
      %p300 = por %p298, %p299
      %p301 = scmp.ne.s32.totalorder %s289, %s290
      %p302 = scmp.eq.s32.totalorder %s28, 1
      %p303 = por %p301, %p302
      %p305 = scmp.ne.s32.totalorder %s290, %s304
      %p306 = scmp.eq.s32.totalorder %s28, 0
      %p307 = por %p305, %p306
      %s308 = ssub.s32 %s22, %s29
      %p309 = scmp.eq.s32.totalorder %s308, 0
      %s311 = sadd.s32 %s310, 1
      %s312 = scalar_select %p309, %s310, %s311
      %p315 = pneg %p309
      %p316 = scmp.eq.s32.totalorder %s22, 1
      %p317 = por %p315, %p316
      %p318 = scmp.ne.s32.totalorder %s310, %s313
      %p319 = scmp.eq.s32.totalorder %s22, 0
      %p320 = por %p318, %p319
      %p321 = scmp.ne.s32.totalorder %s310, %s313
      %p322 = scmp.eq.s32.totalorder %s27, 1
      %p323 = por %p321, %p322
      %p324 = scmp.ne.s32.totalorder %s313, %s314
      %p325 = scmp.eq.s32.totalorder %s27, 0
      %p326 = por %p324, %p325
      %p327 = scmp.ne.s32.totalorder %s313, %s314
      %p328 = scmp.eq.s32.totalorder %s28, 1
      %p329 = por %p327, %p328
      %p331 = scmp.ne.s32.totalorder %s314, %s330
      %p332 = scmp.eq.s32.totalorder %s28, 0
      %p333 = por %p331, %p332
      %p334 = scmp.le.s32.totalorder 1, %s22
      %p335 = scmp.lt.s32.totalorder %s22, 3
      %p336 = pnand %p334, %p335
      %p337 = pneg %p336
      // Predicated region
      $region9: #{dnn_forward.1} parent=5 // pred_check
        _
      $region10: #{dnn_forward.1} parent=5 // pred_check_branch
        %339 = sbr.rel (%p336) target = $region12
      $region11: #{dnn_forward.1} parent=5 // pred_region
        %s340 = ssub.s32 %s22, 1
        // Predicated region
        $region13: #{dnn_forward.1} parent=11 // pred_check
          %p341 = pneg %p69
        $region14: #{dnn_forward.1} parent=11 // pred_check_branch
          %343 = sbr.rel (%p341) target = $region16
        $region15: #{dnn_forward.1} parent=11 // pred_region
          _
        $region16: #{dnn_forward.1} parent=11 // pred_fallthru
          _
        // Predicated region
        $region17: #{dnn_forward.1} parent=11 // pred_check
          %p344 = pneg %p90
        $region18: #{dnn_forward.1} parent=11 // pred_check_branch
          %346 = sbr.rel (%p344) target = $region20
        $region19: #{dnn_forward.1} parent=11 // pred_region
          _
        $region20: #{dnn_forward.1} parent=11 // pred_fallthru
          _
        // Predicated region
        $region21: #{dnn_forward.1} parent=11 // pred_check
          %p347 = pneg %p111
        $region22: #{dnn_forward.1} parent=11 // pred_check_branch
          %349 = sbr.rel (%p347) target = $region24
        $region23: #{dnn_forward.1} parent=11 // pred_region
          _
        $region24: #{dnn_forward.1} parent=11 // pred_fallthru
          _
        // Predicated region
        $region25: #{dnn_forward.1} parent=11 // pred_check
          %p350 = pneg %p132
        $region26: #{dnn_forward.1} parent=11 // pred_check_branch
          %352 = sbr.rel (%p350) target = $region28
        $region27: #{dnn_forward.1} parent=11 // pred_region
          _
        $region28: #{dnn_forward.1} parent=11 // pred_fallthru
          _
        // Predicated region
        $region29: #{dnn_forward.1} parent=11 // pred_check
          %p353 = pneg %p153
        $region30: #{dnn_forward.1} parent=11 // pred_check_branch
          %355 = sbr.rel (%p353) target = $region32
        $region31: #{dnn_forward.1} parent=11 // pred_region
          _
        $region32: #{dnn_forward.1} parent=11 // pred_fallthru
          _
        // Predicated region
        $region33: #{dnn_forward.1} parent=11 // pred_check
          %p356 = pneg %p174
        $region34: #{dnn_forward.1} parent=11 // pred_check_branch
          %358 = sbr.rel (%p356) target = $region36
        $region35: #{dnn_forward.1} parent=11 // pred_region
          _
        $region36: #{dnn_forward.1} parent=11 // pred_fallthru
          _
        // Predicated region
        $region37: #{dnn_forward.1} parent=11 // pred_check
          %p359 = pneg %p195
        $region38: #{dnn_forward.1} parent=11 // pred_check_branch
          %361 = sbr.rel (%p359) target = $region40
        $region39: #{dnn_forward.1} parent=11 // pred_region
          _
        $region40: #{dnn_forward.1} parent=11 // pred_fallthru
          _
        // Predicated region
        $region41: #{dnn_forward.1} parent=11 // pred_check
          %p362 = pneg %p216
        $region42: #{dnn_forward.1} parent=11 // pred_check_branch
          %364 = sbr.rel (%p362) target = $region44
        $region43: #{dnn_forward.1} parent=11 // pred_region
          _
        $region44: #{dnn_forward.1} parent=11 // pred_fallthru
          _
        // Predicated region
        $region45: #{dnn_forward.1} parent=11 // pred_check
          %p365 = pneg %p237
        $region46: #{dnn_forward.1} parent=11 // pred_check_branch
          %367 = sbr.rel (%p365) target = $region48
        $region47: #{dnn_forward.1} parent=11 // pred_region
          _
        $region48: #{dnn_forward.1} parent=11 // pred_fallthru
          _
        // Predicated region
        $region49: #{dnn_forward.1} parent=11 // pred_check
          %p368 = pneg %p258
        $region50: #{dnn_forward.1} parent=11 // pred_check_branch
          %370 = sbr.rel (%p368) target = $region52
        $region51: #{dnn_forward.1} parent=11 // pred_region
          _
        $region52: #{dnn_forward.1} parent=11 // pred_fallthru
          _
        // Predicated region
        $region53: #{dnn_forward.1} parent=11 // pred_check
          %p371 = pneg %p279
        $region54: #{dnn_forward.1} parent=11 // pred_check_branch
          %373 = sbr.rel (%p371) target = $region56
        $region55: #{dnn_forward.1} parent=11 // pred_region
          _
        $region56: #{dnn_forward.1} parent=11 // pred_fallthru
          _
        // Predicated region
        $region57: #{dnn_forward.1} parent=11 // pred_check
          %p374 = pneg %p300
        $region58: #{dnn_forward.1} parent=11 // pred_check_branch
          %376 = sbr.rel (%p374) target = $region60
        $region59: #{dnn_forward.1} parent=11 // pred_region
          _
        $region60: #{dnn_forward.1} parent=11 // pred_fallthru
          _
      $region12: #{dnn_forward.1} parent=5 // pred_fallthru
        _
      %p377 = scmp.lt.s32.totalorder %s22, 2
      // Predicated region
      $region61: #{dnn_forward.1} parent=5 // pred_check
        %p378 = pneg %p377
      $region62: #{dnn_forward.1} parent=5 // pred_check_branch
        %380 = sbr.rel (%p378) target = $region64
      $region63: #{dnn_forward.1} parent=5 // pred_region
        // Predicated region
        $region65: #{dnn_forward.1} parent=63 // pred_check
          %p381 = pneg %p42
        $region66: #{dnn_forward.1} parent=63 // pred_check_branch
          %383 = sbr.rel (%p381) target = $region68
        $region67: #{dnn_forward.1} parent=63 // pred_region
          %s384 = smul.u32 4, %s22
          %p385 = scmp.lt.s32.totalorder %s384, 7
          %s386 = scalar_select %p385, %s384, 7
          %s387 = smul.addr %s386, 4
          %s388 = scalar_lea.vmem %s0, %s387
          %s389 = smul.u32 4, %s22
        $region68: #{dnn_forward.1} parent=63 // pred_fallthru
          _
      $region64: #{dnn_forward.1} parent=5 // pred_fallthru
        _
      %p390 = scmp.le.s32.totalorder 1, %s22
      %p391 = scmp.lt.s32.totalorder %s22, 3
      %p392 = pnand %p390, %p391
      %p393 = pneg %p392
      // Predicated region
      $region69: #{dnn_forward.1} parent=5 // pred_check
        _
      $region70: #{dnn_forward.1} parent=5 // pred_check_branch
        %395 = sbr.rel (%p392) target = $region72
      $region71: #{dnn_forward.1} parent=5 // pred_region
        %s396 = ssub.s32 %s22, 1
        %s397 = smul.u32 4, %s27
        %p398 = scmp.lt.s32.totalorder %s397, 7
        %s399 = scalar_select %p398, %s397, 7
        %s400 = smul.addr %s399, 4
        %s401 = scalar_lea.vmem %s0, %s400
        %p402 = pneg %p48
        %p403 = pneg %p45
        %p404 = pneg %p69
        %p405 = pneg %p66
        %p406 = pneg %p90
        %p407 = pneg %p87
        %p408 = pneg %p111
        %p409 = pneg %p108
        %p410 = pneg %p132
        %p411 = pneg %p129
        %p412 = pneg %p153
        %p413 = pneg %p150
        %p414 = pneg %p174
        %p415 = pneg %p171
        %p416 = pneg %p195
        %p417 = pneg %p192
        %p418 = pneg %p216
        %p419 = pneg %p213
        %p420 = pneg %p237
        %p421 = pneg %p234
        %p422 = pneg %p258
        %p423 = pneg %p255
        %p424 = pneg %p279
        %p425 = pneg %p276
        %p426 = pneg %p300
        %p427 = pneg %p297
        %p428 = pneg %p326
        %p429 = pneg %p323
        %s430 = sand.u32 %s313, 1
        %s431 = scalar_lea.sflag [#allocation3], %s430
        %s432 = sand.u32 %s313, 1
        %s433 = smul.addr %s432, 16
        %s434 = scalar_lea.vmem [#allocation2], %s433
        %s435 = smul.u32 4, %s27
        %p436 = scmp.lt.s32.totalorder %s435, 7
        %s437 = scalar_select %p436, %s435, 7
        %s438 = smul.addr %s437, 4
        %s439 = scalar_lea.vmem %s0, %s438
        %s440 = smul.u32 4, %s27
        %s441 = smul.u32 4, %s27
        %v442 = vld [vmem:[%s439] sm:$0x77]
        %v443 = vld [vmem:[%s439 + $0x8] sm:$0x77]
        %v444 = vld [vmem:[%s1] sm:$0xff]
        %v445 = vld [vmem:[%s1 + $0x8] sm:$0xff]
        %v446 = vld [vmem:[%s1 + $0x10] sm:$0xff]
        %v447 = vld [vmem:[%s1 + $0x18] sm:$0xff]
        %v448 = vld [vmem:[%s1 + $0x20] sm:$0xff]
        %v449 = vld [vmem:[%s1 + $0x28] sm:$0xff]
        %v450 = vld [vmem:[%s1 + $0x30] sm:$0xff]
        %v451 = vld [vmem:[%s1 + $0x38] sm:$0xf]
        %v452 = vld [vmem:[%s2] sm:$0xff]
        %v453 = vld [vmem:[%s2 + $0x8] sm:$0xff]
        %v454 = vld [vmem:[%s2 + $0x10] sm:$0xff]
        %v455 = vld [vmem:[%s2 + $0x18] sm:$0xff]
        %v456 = vld [vmem:[%s2 + $0x20] sm:$0xff]
        %v457 = vld [vmem:[%s2 + $0x28] sm:$0xff]
        %v458 = vld [vmem:[%s2 + $0x30] sm:$0xff]
        %v459 = vld [vmem:[%s2 + $0x38] sm:$0xf]
        %461 = vset.pattern.permute.xlu0 0
        %462 = vperm.xlu0 %461, %v444
        %v463 = vpop.permute.xlu0 %462
        %466 = vset.pattern.permute.xlu0 0
        %467 = vperm.xlu0 %466, %v445
        %v468 = vpop.permute.xlu0 %467
        %471 = vset.pattern.permute.xlu0 0
        %472 = vperm.xlu0 %471, %v446
        %v473 = vpop.permute.xlu0 %472
        %476 = vset.pattern.permute.xlu0 0
        %477 = vperm.xlu0 %476, %v447
        %v478 = vpop.permute.xlu0 %477
        %481 = vset.pattern.permute.xlu0 0
        %482 = vperm.xlu0 %481, %v448
        %v483 = vpop.permute.xlu0 %482
        %486 = vset.pattern.permute.xlu0 0
        %487 = vperm.xlu0 %486, %v449
        %v488 = vpop.permute.xlu0 %487
        %491 = vset.pattern.permute.xlu0 0
        %492 = vperm.xlu0 %491, %v450
        %v493 = vpop.permute.xlu0 %492
        %496 = vset.pattern.permute.xlu0 0
        %497 = vperm.xlu0 %496, %v451
        %v498 = vpop.permute.xlu0 %497
        %v502 = vlaneseq
        %v503 = vshrl.u32 %v502, 7
        %v504 = vsub.s32 0, %v503
        %v505 = vrot.slane %v442, %v504
        %v506 = vlaneseq
        %v507 = vshrl.u32 %v506, 7
        %v508 = vsub.s32 4, %v507
        %v509 = vrot.slane %v442, %v508
        %v510 = vlaneseq
        %v511 = vshrl.u32 %v510, 7
        %v512 = vsub.s32 0, %v511
        %v513 = vrot.slane %v443, %v512
        %v514 = vlaneseq
        %v515 = vshrl.u32 %v514, 7
        %v516 = vsub.s32 4, %v515
        %v517 = vrot.slane %v443, %v516
        %v522 = vlaneseq
        %v523 = vshrl.u32 %v522, 7
        %v524 = vsub.s32 0, %v523
        %v525 = vrot.slane %v505, %v524
        %v526 = vlaneseq
        %v527 = vshrl.u32 %v526, 7
        %v528 = vsub.s32 0, %v527
        %v529 = vrot.slane %v509, %v528
        %v530 = vlaneseq
        %v531 = vshrl.u32 %v530, 7
        %v532 = vsub.s32 0, %v531
        %v533 = vrot.slane %v513, %v532
        %v534 = vlaneseq
        %v535 = vshrl.u32 %v534, 7
        %v536 = vsub.s32 0, %v535
        %v537 = vrot.slane %v517, %v536
        %v538 = vmul.f32 %v463, %v525
        %v539 = vmul.f32 %v463, %v529
        %v540 = vmul.f32 %v463, %v533
        %v541 = vmul.f32 %v463, %v537
        %v542 = vmul.f32 %v468, %v525
        %v543 = vmul.f32 %v468, %v529
        %v544 = vmul.f32 %v468, %v533
        %v545 = vmul.f32 %v468, %v537
        %v546 = vmul.f32 %v473, %v525
        %v547 = vmul.f32 %v473, %v529
        %v548 = vmul.f32 %v473, %v533
        %v549 = vmul.f32 %v473, %v537
        %v550 = vmul.f32 %v478, %v525
        %v551 = vmul.f32 %v478, %v529
        %v552 = vmul.f32 %v478, %v533
        %v553 = vmul.f32 %v478, %v537
        %v554 = vmul.f32 %v483, %v525
        %v555 = vmul.f32 %v483, %v529
        %v556 = vmul.f32 %v483, %v533
        %v557 = vmul.f32 %v483, %v537
        %v558 = vmul.f32 %v488, %v525
        %v559 = vmul.f32 %v488, %v529
        %v560 = vmul.f32 %v488, %v533
        %v561 = vmul.f32 %v488, %v537
        %v562 = vmul.f32 %v493, %v525
        %v563 = vmul.f32 %v493, %v529
        %v564 = vmul.f32 %v493, %v533
        %v565 = vmul.f32 %v493, %v537
        %v566 = vmul.f32 %v498, %v525
        %v567 = vmul.f32 %v498, %v529
        %v568 = vmul.f32 %v498, %v533
        %v569 = vmul.f32 %v498, %v537
        %571 = vset.pattern.permute.xlu0 0
        %572 = vperm.xlu0 %571, %v452
        %v573 = vpop.permute.xlu0 %572
        %576 = vset.pattern.permute.xlu0 0
        %577 = vperm.xlu0 %576, %v453
        %v578 = vpop.permute.xlu0 %577
        %581 = vset.pattern.permute.xlu0 0
        %582 = vperm.xlu0 %581, %v454
        %v583 = vpop.permute.xlu0 %582
        %586 = vset.pattern.permute.xlu0 0
        %587 = vperm.xlu0 %586, %v455
        %v588 = vpop.permute.xlu0 %587
        %591 = vset.pattern.permute.xlu0 0
        %592 = vperm.xlu0 %591, %v456
        %v593 = vpop.permute.xlu0 %592
        %596 = vset.pattern.permute.xlu0 0
        %597 = vperm.xlu0 %596, %v457
        %v598 = vpop.permute.xlu0 %597
        %601 = vset.pattern.permute.xlu0 0
        %602 = vperm.xlu0 %601, %v458
        %v603 = vpop.permute.xlu0 %602
        %606 = vset.pattern.permute.xlu0 0
        %607 = vperm.xlu0 %606, %v459
        %v608 = vpop.permute.xlu0 %607
        %v610 = vadd.f32 %v573, %v538
        %v611 = vadd.f32 %v573, %v539
        %v612 = vadd.f32 %v573, %v540
        %v613 = vadd.f32 %v573, %v541
        %v614 = vadd.f32 %v578, %v542
        %v615 = vadd.f32 %v578, %v543
        %v616 = vadd.f32 %v578, %v544
        %v617 = vadd.f32 %v578, %v545
        %v618 = vadd.f32 %v583, %v546
        %v619 = vadd.f32 %v583, %v547
        %v620 = vadd.f32 %v583, %v548
        %v621 = vadd.f32 %v583, %v549
        %v622 = vadd.f32 %v588, %v550
        %v623 = vadd.f32 %v588, %v551
        %v624 = vadd.f32 %v588, %v552
        %v625 = vadd.f32 %v588, %v553
        %v626 = vadd.f32 %v593, %v554
        %v627 = vadd.f32 %v593, %v555
        %v628 = vadd.f32 %v593, %v556
        %v629 = vadd.f32 %v593, %v557
        %v630 = vadd.f32 %v598, %v558
        %v631 = vadd.f32 %v598, %v559
        %v632 = vadd.f32 %v598, %v560
        %v633 = vadd.f32 %v598, %v561
        %v634 = vadd.f32 %v603, %v562
        %v635 = vadd.f32 %v603, %v563
        %v636 = vadd.f32 %v603, %v564
        %v637 = vadd.f32 %v603, %v565
        %v638 = vadd.f32 %v608, %v566
        %v639 = vadd.f32 %v608, %v567
        %v640 = vadd.f32 %v608, %v568
        %v641 = vadd.f32 %v608, %v569
        %642 = vset.pattern.permute.xlu0 1
        %643 = vperm.xlu0 %642, %v444
        %v644 = vpop.permute.xlu0 %643
        %646 = vset.pattern.permute.xlu0 1
        %647 = vperm.xlu0 %646, %v445
        %v648 = vpop.permute.xlu0 %647
        %650 = vset.pattern.permute.xlu0 1
        %651 = vperm.xlu0 %650, %v446
        %v652 = vpop.permute.xlu0 %651
        %654 = vset.pattern.permute.xlu0 1
        %655 = vperm.xlu0 %654, %v447
        %v656 = vpop.permute.xlu0 %655
        %658 = vset.pattern.permute.xlu0 1
        %659 = vperm.xlu0 %658, %v448
        %v660 = vpop.permute.xlu0 %659
        %662 = vset.pattern.permute.xlu0 1
        %663 = vperm.xlu0 %662, %v449
        %v664 = vpop.permute.xlu0 %663
        %666 = vset.pattern.permute.xlu0 1
        %667 = vperm.xlu0 %666, %v450
        %v668 = vpop.permute.xlu0 %667
        %670 = vset.pattern.permute.xlu0 1
        %671 = vperm.xlu0 %670, %v451
        %v672 = vpop.permute.xlu0 %671
        %v674 = vlaneseq
        %v675 = vshrl.u32 %v674, 7
        %v676 = vsub.s32 1, %v675
        %v677 = vrot.slane %v442, %v676
        %v678 = vlaneseq
        %v679 = vshrl.u32 %v678, 7
        %v680 = vsub.s32 5, %v679
        %v681 = vrot.slane %v442, %v680
        %v682 = vlaneseq
        %v683 = vshrl.u32 %v682, 7
        %v684 = vsub.s32 1, %v683
        %v685 = vrot.slane %v443, %v684
        %v686 = vlaneseq
        %v687 = vshrl.u32 %v686, 7
        %v688 = vsub.s32 5, %v687
        %v689 = vrot.slane %v443, %v688
        %v694 = vlaneseq
        %v695 = vshrl.u32 %v694, 7
        %v696 = vsub.s32 1, %v695
        %v697 = vrot.slane %v677, %v696
        %v698 = vlaneseq
        %v699 = vshrl.u32 %v698, 7
        %v700 = vsub.s32 1, %v699
        %v701 = vrot.slane %v681, %v700
        %v702 = vlaneseq
        %v703 = vshrl.u32 %v702, 7
        %v704 = vsub.s32 1, %v703
        %v705 = vrot.slane %v685, %v704
        %v706 = vlaneseq
        %v707 = vshrl.u32 %v706, 7
        %v708 = vsub.s32 1, %v707
        %v709 = vrot.slane %v689, %v708
        %v710 = vmul.f32 %v644, %v697
        %v711 = vmul.f32 %v644, %v701
        %v712 = vmul.f32 %v644, %v705
        %v713 = vmul.f32 %v644, %v709
        %v714 = vmul.f32 %v648, %v697
        %v715 = vmul.f32 %v648, %v701
        %v716 = vmul.f32 %v648, %v705
        %v717 = vmul.f32 %v648, %v709
        %v718 = vmul.f32 %v652, %v697
        %v719 = vmul.f32 %v652, %v701
        %v720 = vmul.f32 %v652, %v705
        %v721 = vmul.f32 %v652, %v709
        %v722 = vmul.f32 %v656, %v697
        %v723 = vmul.f32 %v656, %v701
        %v724 = vmul.f32 %v656, %v705
        %v725 = vmul.f32 %v656, %v709
        %v726 = vmul.f32 %v660, %v697
        %v727 = vmul.f32 %v660, %v701
        %v728 = vmul.f32 %v660, %v705
        %v729 = vmul.f32 %v660, %v709
        %v730 = vmul.f32 %v664, %v697
        %v731 = vmul.f32 %v664, %v701
        %v732 = vmul.f32 %v664, %v705
        %v733 = vmul.f32 %v664, %v709
        %v734 = vmul.f32 %v668, %v697
        %v735 = vmul.f32 %v668, %v701
        %v736 = vmul.f32 %v668, %v705
        %v737 = vmul.f32 %v668, %v709
        %v738 = vmul.f32 %v672, %v697
        %v739 = vmul.f32 %v672, %v701
        %v740 = vmul.f32 %v672, %v705
        %v741 = vmul.f32 %v672, %v709
        %v742 = vadd.f32 %v610, %v710
        %v743 = vadd.f32 %v611, %v711
        %v744 = vadd.f32 %v612, %v712
        %v745 = vadd.f32 %v613, %v713
        %v746 = vadd.f32 %v614, %v714
        %v747 = vadd.f32 %v615, %v715
        %v748 = vadd.f32 %v616, %v716
        %v749 = vadd.f32 %v617, %v717
        %v750 = vadd.f32 %v618, %v718
        %v751 = vadd.f32 %v619, %v719
        %v752 = vadd.f32 %v620, %v720
        %v753 = vadd.f32 %v621, %v721
        %v754 = vadd.f32 %v622, %v722
        %v755 = vadd.f32 %v623, %v723
        %v756 = vadd.f32 %v624, %v724
        %v757 = vadd.f32 %v625, %v725
        %v758 = vadd.f32 %v626, %v726
        %v759 = vadd.f32 %v627, %v727
        %v760 = vadd.f32 %v628, %v728
        %v761 = vadd.f32 %v629, %v729
        %v762 = vadd.f32 %v630, %v730
        %v763 = vadd.f32 %v631, %v731
        %v764 = vadd.f32 %v632, %v732
        %v765 = vadd.f32 %v633, %v733
        %v766 = vadd.f32 %v634, %v734
        %v767 = vadd.f32 %v635, %v735
        %v768 = vadd.f32 %v636, %v736
        %v769 = vadd.f32 %v637, %v737
        %v770 = vadd.f32 %v638, %v738
        %v771 = vadd.f32 %v639, %v739
        %v772 = vadd.f32 %v640, %v740
        %v773 = vadd.f32 %v641, %v741
        %774 = vset.pattern.permute.xlu0 2
        %775 = vperm.xlu0 %774, %v444
        %v776 = vpop.permute.xlu0 %775
        %778 = vset.pattern.permute.xlu0 2
        %779 = vperm.xlu0 %778, %v445
        %v780 = vpop.permute.xlu0 %779
        %782 = vset.pattern.permute.xlu0 2
        %783 = vperm.xlu0 %782, %v446
        %v784 = vpop.permute.xlu0 %783
        %786 = vset.pattern.permute.xlu0 2
        %787 = vperm.xlu0 %786, %v447
        %v788 = vpop.permute.xlu0 %787
        %790 = vset.pattern.permute.xlu0 2
        %791 = vperm.xlu0 %790, %v448
        %v792 = vpop.permute.xlu0 %791
        %794 = vset.pattern.permute.xlu0 2
        %795 = vperm.xlu0 %794, %v449
        %v796 = vpop.permute.xlu0 %795
        %798 = vset.pattern.permute.xlu0 2
        %799 = vperm.xlu0 %798, %v450
        %v800 = vpop.permute.xlu0 %799
        %802 = vset.pattern.permute.xlu0 2
        %803 = vperm.xlu0 %802, %v451
        %v804 = vpop.permute.xlu0 %803
        %v806 = vlaneseq
        %v807 = vshrl.u32 %v806, 7
        %v808 = vsub.s32 2, %v807
        %v809 = vrot.slane %v442, %v808
        %v810 = vlaneseq
        %v811 = vshrl.u32 %v810, 7
        %v812 = vsub.s32 6, %v811
        %v813 = vrot.slane %v442, %v812
        %v814 = vlaneseq
        %v815 = vshrl.u32 %v814, 7
        %v816 = vsub.s32 2, %v815
        %v817 = vrot.slane %v443, %v816
        %v818 = vlaneseq
        %v819 = vshrl.u32 %v818, 7
        %v820 = vsub.s32 6, %v819
        %v821 = vrot.slane %v443, %v820
        %v826 = vlaneseq
        %v827 = vshrl.u32 %v826, 7
        %v828 = vsub.s32 2, %v827
        %v829 = vrot.slane %v809, %v828
        %v830 = vlaneseq
        %v831 = vshrl.u32 %v830, 7
        %v832 = vsub.s32 2, %v831
        %v833 = vrot.slane %v813, %v832
        %v834 = vlaneseq
        %v835 = vshrl.u32 %v834, 7
        %v836 = vsub.s32 2, %v835
        %v837 = vrot.slane %v817, %v836
        %v838 = vlaneseq
        %v839 = vshrl.u32 %v838, 7
        %v840 = vsub.s32 2, %v839
        %v841 = vrot.slane %v821, %v840
        %v842 = vmul.f32 %v776, %v829
        %v843 = vmul.f32 %v776, %v833
        %v844 = vmul.f32 %v776, %v837
        %v845 = vmul.f32 %v776, %v841
        %v846 = vmul.f32 %v780, %v829
        %v847 = vmul.f32 %v780, %v833
        %v848 = vmul.f32 %v780, %v837
        %v849 = vmul.f32 %v780, %v841
        %v850 = vmul.f32 %v784, %v829
        %v851 = vmul.f32 %v784, %v833
        %v852 = vmul.f32 %v784, %v837
        %v853 = vmul.f32 %v784, %v841
        %v854 = vmul.f32 %v788, %v829
        %v855 = vmul.f32 %v788, %v833
        %v856 = vmul.f32 %v788, %v837
        %v857 = vmul.f32 %v788, %v841
        %v858 = vmul.f32 %v792, %v829
        %v859 = vmul.f32 %v792, %v833
        %v860 = vmul.f32 %v792, %v837
        %v861 = vmul.f32 %v792, %v841
        %v862 = vmul.f32 %v796, %v829
        %v863 = vmul.f32 %v796, %v833
        %v864 = vmul.f32 %v796, %v837
        %v865 = vmul.f32 %v796, %v841
        %v866 = vmul.f32 %v800, %v829
        %v867 = vmul.f32 %v800, %v833
        %v868 = vmul.f32 %v800, %v837
        %v869 = vmul.f32 %v800, %v841
        %v870 = vmul.f32 %v804, %v829
        %v871 = vmul.f32 %v804, %v833
        %v872 = vmul.f32 %v804, %v837
        %v873 = vmul.f32 %v804, %v841
        %v874 = vadd.f32 %v742, %v842
        %v875 = vadd.f32 %v743, %v843
        %v876 = vadd.f32 %v744, %v844
        %v877 = vadd.f32 %v745, %v845
        %v878 = vadd.f32 %v746, %v846
        %v879 = vadd.f32 %v747, %v847
        %v880 = vadd.f32 %v748, %v848
        %v881 = vadd.f32 %v749, %v849
        %v882 = vadd.f32 %v750, %v850
        %v883 = vadd.f32 %v751, %v851
        %v884 = vadd.f32 %v752, %v852
        %v885 = vadd.f32 %v753, %v853
        %v886 = vadd.f32 %v754, %v854
        %v887 = vadd.f32 %v755, %v855
        %v888 = vadd.f32 %v756, %v856
        %v889 = vadd.f32 %v757, %v857
        %v890 = vadd.f32 %v758, %v858
        %v891 = vadd.f32 %v759, %v859
        %v892 = vadd.f32 %v760, %v860
        %v893 = vadd.f32 %v761, %v861
        %v894 = vadd.f32 %v762, %v862
        %v895 = vadd.f32 %v763, %v863
        %v896 = vadd.f32 %v764, %v864
        %v897 = vadd.f32 %v765, %v865
        %v898 = vadd.f32 %v766, %v866
        %v899 = vadd.f32 %v767, %v867
        %v900 = vadd.f32 %v768, %v868
        %v901 = vadd.f32 %v769, %v869
        %v902 = vadd.f32 %v770, %v870
        %v903 = vadd.f32 %v771, %v871
        %v904 = vadd.f32 %v772, %v872
        %v905 = vadd.f32 %v773, %v873
        %v906 = vtanh.pop %v874
        %v907 = vtanh.pop %v875
        %v908 = vtanh.pop %v876
        %v909 = vtanh.pop %v877
        %v910 = vtanh.pop %v878
        %v911 = vtanh.pop %v879
        %v912 = vtanh.pop %v880
        %v913 = vtanh.pop %v881
        %v914 = vtanh.pop %v882
        %v915 = vtanh.pop %v883
        %v916 = vtanh.pop %v884
        %v917 = vtanh.pop %v885
        %v918 = vtanh.pop %v886
        %v919 = vtanh.pop %v887
        %v920 = vtanh.pop %v888
        %v921 = vtanh.pop %v889
        %v922 = vtanh.pop %v890
        %v923 = vtanh.pop %v891
        %v924 = vtanh.pop %v892
        %v925 = vtanh.pop %v893
        %v926 = vtanh.pop %v894
        %v927 = vtanh.pop %v895
        %v928 = vtanh.pop %v896
        %v929 = vtanh.pop %v897
        %v930 = vtanh.pop %v898
        %v931 = vtanh.pop %v899
        %v932 = vtanh.pop %v900
        %v933 = vtanh.pop %v901
        %v934 = vtanh.pop %v902
        %v935 = vtanh.pop %v903
        %v936 = vtanh.pop %v904
        %v937 = vtanh.pop %v905
        %v938 = vld [vmem:[%s3] sm:$0xff]
        %v939 = vld [vmem:[%s3 + $0x8] sm:$0xff]
        %v940 = vld [vmem:[%s3 + $0x10] sm:$0xff]
        %v941 = vld [vmem:[%s3 + $0x18] sm:$0xff]
        %v942 = vld [vmem:[%s3 + $0x20] sm:$0xff]
        %v943 = vld [vmem:[%s4] sm:$0xff]
        %v944 = vld [vmem:[%s4 + $0x8] sm:$0xff]
        %v945 = vld [vmem:[%s4 + $0x10] sm:$0xff]
        %v946 = vld [vmem:[%s4 + $0x18] sm:$0xff]
        %v947 = vld [vmem:[%s4 + $0x20] sm:$0xff]
        %949 = vset.pattern.permute.xlu0 0
        %950 = vperm.xlu0 %949, %v943
        %v951 = vpop.permute.xlu0 %950
        %954 = vset.pattern.permute.xlu0 0
        %955 = vperm.xlu0 %954, %v944
        %v956 = vpop.permute.xlu0 %955
        %959 = vset.pattern.permute.xlu0 0
        %960 = vperm.xlu0 %959, %v945
        %v961 = vpop.permute.xlu0 %960
        %964 = vset.pattern.permute.xlu0 0
        %965 = vperm.xlu0 %964, %v946
        %v966 = vpop.permute.xlu0 %965
        %969 = vset.pattern.permute.xlu0 0
        %970 = vperm.xlu0 %969, %v947
        %v971 = vpop.permute.xlu0 %970
        %vm973 = vcmask 490496
        %v975 = vsel %vm973, %v938, 0
        %v978 = vsel %vm973, %v939, 0
        %v981 = vsel %vm973, %v940, 0
        %v984 = vsel %vm973, %v941, 0
        %v987 = vsel %vm973, %v942, 0
        %vm989 = vcmask 1043456
        %v991 = vsel %vm989, %v934, 0
        %v994 = vsel %vm989, %v935, 0
        %v997 = vsel %vm989, %v936, 0
        %v1000 = vsel %vm989, %v937, 0
        %1002 = vmatprep.subr.mxu0 %v907
        %1003 = vmatpush1.msra.mxu0 %v906
        %1004 = vmatprep.subr.mxu0 %v911
        %1005 = vmatpush1.msra.mxu0 %v910
        %1006 = vmatprep.subr.mxu0 %v915
        %1007 = vmatpush1.msra.mxu0 %v914
        %1008 = vmatprep.subr.mxu0 %v919
        %1009 = vmatpush1.msra.mxu0 %v918
        %1010 = vmatprep.subr.mxu0 %v923
        %1011 = vmatpush1.msra.mxu0 %v922
        %1012 = vmatprep.subr.mxu0 %v927
        %1013 = vmatpush1.msra.mxu0 %v926
        %1014 = vmatprep.subr.mxu0 %v931
        %1015 = vmatpush1.msra.mxu0 %v930
        %1016 = vmatprep.subr.mxu0 %v994
        %1017 = vmatpush1.msra.mxu0 %v991
        %1018 = vmatprep.subr.mxu0 0.0
        %1019 = vmatpush1.msra.mxu0 0.0
        %1020 = vmatprep.subr.mxu0 0.0
        %1021 = vmatpush1.msra.mxu0 0.0
        %1022 = vmatprep.subr.mxu0 0.0
        %1023 = vmatpush1.msra.mxu0 0.0
        %1024 = vmatprep.subr.mxu0 0.0
        %1025 = vmatpush1.msra.mxu0 0.0
        %1026 = vmatprep.subr.mxu0 0.0
        %1027 = vmatpush1.msra.mxu0 0.0
        %1028 = vmatprep.subr.mxu0 0.0
        %1029 = vmatpush1.msra.mxu0 0.0
        %1030 = vmatprep.subr.mxu0 0.0
        %1031 = vmatpush1.msra.mxu0 0.0
        %1032 = vmatprep.subr.mxu0 0.0
        %1033 = vmatpush1.msra.mxu0 0.0
        %1034 = vmatprep.subr.mxu0 0.0
        %1035 = vmatpush1.msra.mxu0 0.0
        %1036 = vmatprep.subr.mxu0 0.0
        %1037 = vmatpush1.msra.mxu0 0.0
        %1038 = vmatprep.subr.mxu0 0.0
        %1039 = vmatpush1.msra.mxu0 0.0
        %1040 = vmatprep.subr.mxu0 0.0
        %1041 = vmatpush1.msra.mxu0 0.0
        %1042 = vmatprep.subr.mxu0 0.0
        %1043 = vmatpush1.msra.mxu0 0.0
        %1044 = vmatprep.subr.mxu0 0.0
        %1045 = vmatpush1.msra.mxu0 0.0
        %1046 = vmatprep.subr.mxu0 0.0
        %1047 = vmatpush1.msra.mxu0 0.0
        %1048 = vmatprep.subr.mxu0 0.0
        %1049 = vmatpush1.msra.mxu0 0.0
        %1050 = vmatprep.subr.mxu0 0.0
        %1051 = vmatpush1.msra.mxu0 0.0
        %1052 = vmatprep.subr.mxu0 0.0
        %1053 = vmatpush1.msra.mxu0 0.0
        %1054 = vmatprep.subr.mxu0 0.0
        %1055 = vmatpush1.msra.mxu0 0.0
        %1056 = vmatprep.subr.mxu0 0.0
        %1057 = vmatpush1.msra.mxu0 0.0
        %1058 = vmatprep.subr.mxu0 0.0
        %1059 = vmatpush1.msra.mxu0 0.0
        %1060 = vmatprep.subr.mxu0 0.0
        %1061 = vmatpush1.msra.mxu0 0.0
        %1062 = vmatprep.subr.mxu0 0.0
        %1063 = vmatpush1.msra.mxu0 0.0
        %1064 = vmatprep.subr.mxu0 0.0
        %1065 = vmatpush1.msra.mxu0 0.0
        %1066 = vmatprep.mubr.f32.mxu0 0.0
        %1067 = vmatmul.mubr.f32.gmra.mrb[0].mxu0 %v975
        %v1068 = vpop.f32.mrb[0].mxu0
        %v1069 = vadd.f32 %v951, %v1068
        %v1070 = vpop.f32.mrb[0].mxu0
        %v1071 = vadd.f32 %v951, %v1070
        %1072 = vmatprep.mubr.f32.mxu0 0.0
        %1073 = vmatmul.mubr.f32.gmra.mrb[0].mxu0 %v978
        %v1074 = vpop.f32.mrb[0].mxu0
        %v1075 = vadd.f32 %v956, %v1074
        %v1076 = vpop.f32.mrb[0].mxu0
        %v1077 = vadd.f32 %v956, %v1076
        %1078 = vmatprep.mubr.f32.mxu0 0.0
        %1079 = vmatmul.mubr.f32.gmra.mrb[0].mxu0 %v981
        %v1080 = vpop.f32.mrb[0].mxu0
        %v1081 = vadd.f32 %v961, %v1080
        %v1082 = vpop.f32.mrb[0].mxu0
        %v1083 = vadd.f32 %v961, %v1082
        %1084 = vmatprep.mubr.f32.mxu0 0.0
        %1085 = vmatmul.mubr.f32.gmra.mrb[0].mxu0 %v984
        %v1086 = vpop.f32.mrb[0].mxu0
        %v1087 = vadd.f32 %v966, %v1086
        %v1088 = vpop.f32.mrb[0].mxu0
        %v1089 = vadd.f32 %v966, %v1088
        %1090 = vmatprep.mubr.f32.mxu0 0.0
        %1091 = vmatmul.mubr.f32.gmra.mrb[0].mxu0 %v987
        %v1092 = vpop.f32.mrb[0].mxu0
        %v1093 = vadd.f32 %v971, %v1092
        %v1094 = vpop.f32.mrb[0].mxu0
        %v1095 = vadd.f32 %v971, %v1094
        %1096 = vdwg.mxu0
        %1097 = vmatprep.subr.mxu0 %v909
        %1098 = vmatpush1.msra.mxu0 %v908
        %1099 = vmatprep.subr.mxu0 %v913
        %1100 = vmatpush1.msra.mxu0 %v912
        %1101 = vmatprep.subr.mxu0 %v917
        %1102 = vmatpush1.msra.mxu0 %v916
        %1103 = vmatprep.subr.mxu0 %v921
        %1104 = vmatpush1.msra.mxu0 %v920
        %1105 = vmatprep.subr.mxu0 %v925
        %1106 = vmatpush1.msra.mxu0 %v924
        %1107 = vmatprep.subr.mxu0 %v929
        %1108 = vmatpush1.msra.mxu0 %v928
        %1109 = vmatprep.subr.mxu0 %v933
        %1110 = vmatpush1.msra.mxu0 %v932
        %1111 = vmatprep.subr.mxu0 %v1000
        %1112 = vmatpush1.msra.mxu0 %v997
        %1113 = vmatprep.subr.mxu0 0.0
        %1114 = vmatpush1.msra.mxu0 0.0
        %1115 = vmatprep.subr.mxu0 0.0
        %1116 = vmatpush1.msra.mxu0 0.0
        %1117 = vmatprep.subr.mxu0 0.0
        %1118 = vmatpush1.msra.mxu0 0.0
        %1119 = vmatprep.subr.mxu0 0.0
        %1120 = vmatpush1.msra.mxu0 0.0
        %1121 = vmatprep.subr.mxu0 0.0
        %1122 = vmatpush1.msra.mxu0 0.0
        %1123 = vmatprep.subr.mxu0 0.0
        %1124 = vmatpush1.msra.mxu0 0.0
        %1125 = vmatprep.subr.mxu0 0.0
        %1126 = vmatpush1.msra.mxu0 0.0
        %1127 = vmatprep.subr.mxu0 0.0
        %1128 = vmatpush1.msra.mxu0 0.0
        %1129 = vmatprep.subr.mxu0 0.0
        %1130 = vmatpush1.msra.mxu0 0.0
        %1131 = vmatprep.subr.mxu0 0.0
        %1132 = vmatpush1.msra.mxu0 0.0
        %1133 = vmatprep.subr.mxu0 0.0
        %1134 = vmatpush1.msra.mxu0 0.0
        %1135 = vmatprep.subr.mxu0 0.0
        %1136 = vmatpush1.msra.mxu0 0.0
        %1137 = vmatprep.subr.mxu0 0.0
        %1138 = vmatpush1.msra.mxu0 0.0
        %1139 = vmatprep.subr.mxu0 0.0
        %1140 = vmatpush1.msra.mxu0 0.0
        %1141 = vmatprep.subr.mxu0 0.0
        %1142 = vmatpush1.msra.mxu0 0.0
        %1143 = vmatprep.subr.mxu0 0.0
        %1144 = vmatpush1.msra.mxu0 0.0
        %1145 = vmatprep.subr.mxu0 0.0
        %1146 = vmatpush1.msra.mxu0 0.0
        %1147 = vmatprep.subr.mxu0 0.0
        %1148 = vmatpush1.msra.mxu0 0.0
        %1149 = vmatprep.subr.mxu0 0.0
        %1150 = vmatpush1.msra.mxu0 0.0
        %1151 = vmatprep.subr.mxu0 0.0
        %1152 = vmatpush1.msra.mxu0 0.0
        %1153 = vmatprep.subr.mxu0 0.0
        %1154 = vmatpush1.msra.mxu0 0.0
        %1155 = vmatprep.subr.mxu0 0.0
        %1156 = vmatpush1.msra.mxu0 0.0
        %1157 = vmatprep.subr.mxu0 0.0
        %1158 = vmatpush1.msra.mxu0 0.0
        %1159 = vmatprep.subr.mxu0 0.0
        %1160 = vmatpush1.msra.mxu0 0.0
        %1161 = vmatprep.mubr.f32.mxu0 0.0
        %1162 = vmatmul.mubr.f32.gmra.mrb[0].mxu0 %v975
        %v1163 = vpop.f32.mrb[0].mxu0
        %v1164 = vadd.f32 %v951, %v1163
        %v1165 = vpop.f32.mrb[0].mxu0
        %v1166 = vadd.f32 %v951, %v1165
        %1167 = vmatprep.mubr.f32.mxu0 0.0
        %1168 = vmatmul.mubr.f32.gmra.mrb[0].mxu0 %v978
        %v1169 = vpop.f32.mrb[0].mxu0
        %v1170 = vadd.f32 %v956, %v1169
        %v1171 = vpop.f32.mrb[0].mxu0
        %v1172 = vadd.f32 %v956, %v1171
        %1173 = vmatprep.mubr.f32.mxu0 0.0
        %1174 = vmatmul.mubr.f32.gmra.mrb[0].mxu0 %v981
        %v1175 = vpop.f32.mrb[0].mxu0
        %v1176 = vadd.f32 %v961, %v1175
        %v1177 = vpop.f32.mrb[0].mxu0
        %v1178 = vadd.f32 %v961, %v1177
        %1179 = vmatprep.mubr.f32.mxu0 0.0
        %1180 = vmatmul.mubr.f32.gmra.mrb[0].mxu0 %v984
        %v1181 = vpop.f32.mrb[0].mxu0
        %v1182 = vadd.f32 %v966, %v1181
        %v1183 = vpop.f32.mrb[0].mxu0
        %v1184 = vadd.f32 %v966, %v1183
        %1185 = vmatprep.mubr.f32.mxu0 0.0
        %1186 = vmatmul.mubr.f32.gmra.mrb[0].mxu0 %v987
        %v1187 = vpop.f32.mrb[0].mxu0
        %v1188 = vadd.f32 %v971, %v1187
        %v1189 = vpop.f32.mrb[0].mxu0
        %v1190 = vadd.f32 %v971, %v1189
        %1191 = vdwg.mxu0
        %v1192 = vtanh.pop %v1069
        %v1193 = vtanh.pop %v1071
        %v1194 = vtanh.pop %v1164
        %v1195 = vtanh.pop %v1166
        %v1196 = vtanh.pop %v1075
        %v1197 = vtanh.pop %v1077
        %v1198 = vtanh.pop %v1170
        %v1199 = vtanh.pop %v1172
        %v1200 = vtanh.pop %v1081
        %v1201 = vtanh.pop %v1083
        %v1202 = vtanh.pop %v1176
        %v1203 = vtanh.pop %v1178
        %v1204 = vtanh.pop %v1087
        %v1205 = vtanh.pop %v1089
        %v1206 = vtanh.pop %v1182
        %v1207 = vtanh.pop %v1184
        %v1208 = vtanh.pop %v1093
        %v1209 = vtanh.pop %v1095
        %v1210 = vtanh.pop %v1188
        %v1211 = vtanh.pop %v1190
        %v1212 = vld [vmem:[%s5] sm:$0xff]
        %v1213 = vld [vmem:[%s5 + $0x8] sm:$0xff]
        %v1214 = vld [vmem:[%s5 + $0x10] sm:$0xff]
        %v1215 = vld [vmem:[%s5 + $0x18] sm:$0xff]
        %v1216 = vld [vmem:[%s5 + $0x20] sm:$0xff]
        %v1217 = vld [vmem:[%s6] sm:$0xff]
        %v1218 = vld [vmem:[%s6 + $0x8] sm:$0xff]
        %v1219 = vld [vmem:[%s6 + $0x10] sm:$0xff]
        %v1220 = vld [vmem:[%s6 + $0x18] sm:$0xff]
        %v1221 = vld [vmem:[%s6 + $0x20] sm:$0xff]
        %1223 = vset.pattern.permute.xlu0 0
        %1224 = vperm.xlu0 %1223, %v1217
        %v1225 = vpop.permute.xlu0 %1224
        %1228 = vset.pattern.permute.xlu0 0
        %1229 = vperm.xlu0 %1228, %v1218
        %v1230 = vpop.permute.xlu0 %1229
        %1233 = vset.pattern.permute.xlu0 0
        %1234 = vperm.xlu0 %1233, %v1219
        %v1235 = vpop.permute.xlu0 %1234
        %1238 = vset.pattern.permute.xlu0 0
        %1239 = vperm.xlu0 %1238, %v1220
        %v1240 = vpop.permute.xlu0 %1239
        %1243 = vset.pattern.permute.xlu0 0
        %1244 = vperm.xlu0 %1243, %v1221
        %v1245 = vpop.permute.xlu0 %1244
        %vm1247 = vcmask 326656
        %v1249 = vsel %vm1247, %v1212, 0
        %v1252 = vsel %vm1247, %v1213, 0
        %v1255 = vsel %vm1247, %v1214, 0
        %v1258 = vsel %vm1247, %v1215, 0
        %v1261 = vsel %vm1247, %v1216, 0
        %1263 = vmatprep.subr.mxu0 %v1193
        %1264 = vmatpush1.msra.mxu0 %v1192
        %1265 = vmatprep.subr.mxu0 %v1197
        %1266 = vmatpush1.msra.mxu0 %v1196
        %1267 = vmatprep.subr.mxu0 %v1201
        %1268 = vmatpush1.msra.mxu0 %v1200
        %1269 = vmatprep.subr.mxu0 %v1205
        %1270 = vmatpush1.msra.mxu0 %v1204
        %1271 = vmatprep.subr.mxu0 %v1209
        %1272 = vmatpush1.msra.mxu0 %v1208
        %1273 = vmatprep.subr.mxu0 0.0
        %1274 = vmatpush1.msra.mxu0 0.0
        %1275 = vmatprep.subr.mxu0 0.0
        %1276 = vmatpush1.msra.mxu0 0.0
        %1277 = vmatprep.subr.mxu0 0.0
        %1278 = vmatpush1.msra.mxu0 0.0
        %1279 = vmatprep.subr.mxu0 0.0
        %1280 = vmatpush1.msra.mxu0 0.0
        %1281 = vmatprep.subr.mxu0 0.0
        %1282 = vmatpush1.msra.mxu0 0.0
        %1283 = vmatprep.subr.mxu0 0.0
        %1284 = vmatpush1.msra.mxu0 0.0
        %1285 = vmatprep.subr.mxu0 0.0
        %1286 = vmatpush1.msra.mxu0 0.0
        %1287 = vmatprep.subr.mxu0 0.0
        %1288 = vmatpush1.msra.mxu0 0.0
        %1289 = vmatprep.subr.mxu0 0.0
        %1290 = vmatpush1.msra.mxu0 0.0
        %1291 = vmatprep.subr.mxu0 0.0
        %1292 = vmatpush1.msra.mxu0 0.0
        %1293 = vmatprep.subr.mxu0 0.0
        %1294 = vmatpush1.msra.mxu0 0.0
        %1295 = vmatprep.subr.mxu0 0.0
        %1296 = vmatpush1.msra.mxu0 0.0
        %1297 = vmatprep.subr.mxu0 0.0
        %1298 = vmatpush1.msra.mxu0 0.0
        %1299 = vmatprep.subr.mxu0 0.0
        %1300 = vmatpush1.msra.mxu0 0.0
        %1301 = vmatprep.subr.mxu0 0.0
        %1302 = vmatpush1.msra.mxu0 0.0
        %1303 = vmatprep.subr.mxu0 0.0
        %1304 = vmatpush1.msra.mxu0 0.0
        %1305 = vmatprep.subr.mxu0 0.0
        %1306 = vmatpush1.msra.mxu0 0.0
        %1307 = vmatprep.subr.mxu0 0.0
        %1308 = vmatpush1.msra.mxu0 0.0
        %1309 = vmatprep.subr.mxu0 0.0
        %1310 = vmatpush1.msra.mxu0 0.0
        %1311 = vmatprep.subr.mxu0 0.0
        %1312 = vmatpush1.msra.mxu0 0.0
        %1313 = vmatprep.subr.mxu0 0.0
        %1314 = vmatpush1.msra.mxu0 0.0
        %1315 = vmatprep.subr.mxu0 0.0
        %1316 = vmatpush1.msra.mxu0 0.0
        %1317 = vmatprep.subr.mxu0 0.0
        %1318 = vmatpush1.msra.mxu0 0.0
        %1319 = vmatprep.subr.mxu0 0.0
        %1320 = vmatpush1.msra.mxu0 0.0
        %1321 = vmatprep.subr.mxu0 0.0
        %1322 = vmatpush1.msra.mxu0 0.0
        %1323 = vmatprep.subr.mxu0 0.0
        %1324 = vmatpush1.msra.mxu0 0.0
        %1325 = vmatprep.subr.mxu0 0.0
        %1326 = vmatpush1.msra.mxu0 0.0
        %1327 = vmatprep.mubr.f32.mxu0 0.0
        %1328 = vmatmul.mubr.f32.gmra.mrb[0].mxu0 %v1249
        %v1329 = vpop.f32.mrb[0].mxu0
        %v1330 = vadd.f32 %v1225, %v1329
        %v1331 = vpop.f32.mrb[0].mxu0
        %v1332 = vadd.f32 %v1225, %v1331
        %1333 = vmatprep.mubr.f32.mxu0 0.0
        %1334 = vmatmul.mubr.f32.gmra.mrb[0].mxu0 %v1252
        %v1335 = vpop.f32.mrb[0].mxu0
        %v1336 = vadd.f32 %v1230, %v1335
        %v1337 = vpop.f32.mrb[0].mxu0
        %v1338 = vadd.f32 %v1230, %v1337
        %1339 = vmatprep.mubr.f32.mxu0 0.0
        %1340 = vmatmul.mubr.f32.gmra.mrb[0].mxu0 %v1255
        %v1341 = vpop.f32.mrb[0].mxu0
        %v1342 = vadd.f32 %v1235, %v1341
        %v1343 = vpop.f32.mrb[0].mxu0
        %v1344 = vadd.f32 %v1235, %v1343
        %1345 = vmatprep.mubr.f32.mxu0 0.0
        %1346 = vmatmul.mubr.f32.gmra.mrb[0].mxu0 %v1258
        %v1347 = vpop.f32.mrb[0].mxu0
        %v1348 = vadd.f32 %v1240, %v1347
        %v1349 = vpop.f32.mrb[0].mxu0
        %v1350 = vadd.f32 %v1240, %v1349
        %1351 = vmatprep.mubr.f32.mxu0 0.0
        %1352 = vmatmul.mubr.f32.gmra.mrb[0].mxu0 %v1261
        %v1353 = vpop.f32.mrb[0].mxu0
        %v1354 = vadd.f32 %v1245, %v1353
        %v1355 = vpop.f32.mrb[0].mxu0
        %v1356 = vadd.f32 %v1245, %v1355
        %1357 = vdwg.mxu0
        %1358 = vmatprep.subr.mxu0 %v1195
        %1359 = vmatpush1.msra.mxu0 %v1194
        %1360 = vmatprep.subr.mxu0 %v1199
        %1361 = vmatpush1.msra.mxu0 %v1198
        %1362 = vmatprep.subr.mxu0 %v1203
        %1363 = vmatpush1.msra.mxu0 %v1202
        %1364 = vmatprep.subr.mxu0 %v1207
        %1365 = vmatpush1.msra.mxu0 %v1206
        %1366 = vmatprep.subr.mxu0 %v1211
        %1367 = vmatpush1.msra.mxu0 %v1210
        %1368 = vmatprep.subr.mxu0 0.0
        %1369 = vmatpush1.msra.mxu0 0.0
        %1370 = vmatprep.subr.mxu0 0.0
        %1371 = vmatpush1.msra.mxu0 0.0
        %1372 = vmatprep.subr.mxu0 0.0
        %1373 = vmatpush1.msra.mxu0 0.0
        %1374 = vmatprep.subr.mxu0 0.0
        %1375 = vmatpush1.msra.mxu0 0.0
        %1376 = vmatprep.subr.mxu0 0.0
        %1377 = vmatpush1.msra.mxu0 0.0
        %1378 = vmatprep.subr.mxu0 0.0
        %1379 = vmatpush1.msra.mxu0 0.0
        %1380 = vmatprep.subr.mxu0 0.0
        %1381 = vmatpush1.msra.mxu0 0.0
        %1382 = vmatprep.subr.mxu0 0.0
        %1383 = vmatpush1.msra.mxu0 0.0
        %1384 = vmatprep.subr.mxu0 0.0
        %1385 = vmatpush1.msra.mxu0 0.0
        %1386 = vmatprep.subr.mxu0 0.0
        %1387 = vmatpush1.msra.mxu0 0.0
        %1388 = vmatprep.subr.mxu0 0.0
        %1389 = vmatpush1.msra.mxu0 0.0
        %1390 = vmatprep.subr.mxu0 0.0
        %1391 = vmatpush1.msra.mxu0 0.0
        %1392 = vmatprep.subr.mxu0 0.0
        %1393 = vmatpush1.msra.mxu0 0.0
        %1394 = vmatprep.subr.mxu0 0.0
        %1395 = vmatpush1.msra.mxu0 0.0
        %1396 = vmatprep.subr.mxu0 0.0
        %1397 = vmatpush1.msra.mxu0 0.0
        %1398 = vmatprep.subr.mxu0 0.0
        %1399 = vmatpush1.msra.mxu0 0.0
        %1400 = vmatprep.subr.mxu0 0.0
        %1401 = vmatpush1.msra.mxu0 0.0
        %1402 = vmatprep.subr.mxu0 0.0
        %1403 = vmatpush1.msra.mxu0 0.0
        %1404 = vmatprep.subr.mxu0 0.0
        %1405 = vmatpush1.msra.mxu0 0.0
        %1406 = vmatprep.subr.mxu0 0.0
        %1407 = vmatpush1.msra.mxu0 0.0
        %1408 = vmatprep.subr.mxu0 0.0
        %1409 = vmatpush1.msra.mxu0 0.0
        %1410 = vmatprep.subr.mxu0 0.0
        %1411 = vmatpush1.msra.mxu0 0.0
        %1412 = vmatprep.subr.mxu0 0.0
        %1413 = vmatpush1.msra.mxu0 0.0
        %1414 = vmatprep.subr.mxu0 0.0
        %1415 = vmatpush1.msra.mxu0 0.0
        %1416 = vmatprep.subr.mxu0 0.0
        %1417 = vmatpush1.msra.mxu0 0.0
        %1418 = vmatprep.subr.mxu0 0.0
        %1419 = vmatpush1.msra.mxu0 0.0
        %1420 = vmatprep.subr.mxu0 0.0
        %1421 = vmatpush1.msra.mxu0 0.0
        %1422 = vmatprep.mubr.f32.mxu0 0.0
        %1423 = vmatmul.mubr.f32.gmra.mrb[0].mxu0 %v1249
        %v1424 = vpop.f32.mrb[0].mxu0
        %v1425 = vadd.f32 %v1225, %v1424
        %v1426 = vpop.f32.mrb[0].mxu0
        %v1427 = vadd.f32 %v1225, %v1426
        %1428 = vmatprep.mubr.f32.mxu0 0.0
        %1429 = vmatmul.mubr.f32.gmra.mrb[0].mxu0 %v1252
        %v1430 = vpop.f32.mrb[0].mxu0
        %v1431 = vadd.f32 %v1230, %v1430
        %v1432 = vpop.f32.mrb[0].mxu0
        %v1433 = vadd.f32 %v1230, %v1432
        %1434 = vmatprep.mubr.f32.mxu0 0.0
        %1435 = vmatmul.mubr.f32.gmra.mrb[0].mxu0 %v1255
        %v1436 = vpop.f32.mrb[0].mxu0
        %v1437 = vadd.f32 %v1235, %v1436
        %v1438 = vpop.f32.mrb[0].mxu0
        %v1439 = vadd.f32 %v1235, %v1438
        %1440 = vmatprep.mubr.f32.mxu0 0.0
        %1441 = vmatmul.mubr.f32.gmra.mrb[0].mxu0 %v1258
        %v1442 = vpop.f32.mrb[0].mxu0
        %v1443 = vadd.f32 %v1240, %v1442
        %v1444 = vpop.f32.mrb[0].mxu0
        %v1445 = vadd.f32 %v1240, %v1444
        %1446 = vmatprep.mubr.f32.mxu0 0.0
        %1447 = vmatmul.mubr.f32.gmra.mrb[0].mxu0 %v1261
        %v1448 = vpop.f32.mrb[0].mxu0
        %v1449 = vadd.f32 %v1245, %v1448
        %v1450 = vpop.f32.mrb[0].mxu0
        %v1451 = vadd.f32 %v1245, %v1450
        %1452 = vdwg.mxu0
        %v1453 = vtanh.pop %v1330
        %v1454 = vtanh.pop %v1332
        %v1455 = vtanh.pop %v1425
        %v1456 = vtanh.pop %v1427
        %v1457 = vtanh.pop %v1336
        %v1458 = vtanh.pop %v1338
        %v1459 = vtanh.pop %v1431
        %v1460 = vtanh.pop %v1433
        %v1461 = vtanh.pop %v1342
        %v1462 = vtanh.pop %v1344
        %v1463 = vtanh.pop %v1437
        %v1464 = vtanh.pop %v1439
        %v1465 = vtanh.pop %v1348
        %v1466 = vtanh.pop %v1350
        %v1467 = vtanh.pop %v1443
        %v1468 = vtanh.pop %v1445
        %v1469 = vtanh.pop %v1354
        %v1470 = vtanh.pop %v1356
        %v1471 = vtanh.pop %v1449
        %v1472 = vtanh.pop %v1451
        %v1473 = vld [vmem:[%s7] sm:$0xff]
        %v1474 = vld [vmem:[%s7 + $0x8] sm:$0xff]
        %v1475 = vld [vmem:[%s7 + $0x10] sm:$0xf]
        %v1476 = vld [vmem:[%s8] sm:$0xff]
        %v1477 = vld [vmem:[%s8 + $0x8] sm:$0xff]
        %v1478 = vld [vmem:[%s8 + $0x10] sm:$0xf]
        %1480 = vset.pattern.permute.xlu0 0
        %1481 = vperm.xlu0 %1480, %v1476
        %v1482 = vpop.permute.xlu0 %1481
        %1485 = vset.pattern.permute.xlu0 0
        %1486 = vperm.xlu0 %1485, %v1477
        %v1487 = vpop.permute.xlu0 %1486
        %1490 = vset.pattern.permute.xlu0 0
        %1491 = vperm.xlu0 %1490, %v1478
        %v1492 = vpop.permute.xlu0 %1491
        %v1495 = vsel %vm1247, %v1473, 0
        %v1498 = vsel %vm1247, %v1474, 0
        %v1501 = vsel %vm1247, %v1475, 0
        %1503 = vmatprep.subr.mxu0 %v1454
        %1504 = vmatpush1.msra.mxu0 %v1453
        %1505 = vmatprep.subr.mxu0 %v1458
        %1506 = vmatpush1.msra.mxu0 %v1457
        %1507 = vmatprep.subr.mxu0 %v1462
        %1508 = vmatpush1.msra.mxu0 %v1461
        %1509 = vmatprep.subr.mxu0 %v1466
        %1510 = vmatpush1.msra.mxu0 %v1465
        %1511 = vmatprep.subr.mxu0 %v1470
        %1512 = vmatpush1.msra.mxu0 %v1469
        %1513 = vmatprep.subr.mxu0 0.0
        %1514 = vmatpush1.msra.mxu0 0.0
        %1515 = vmatprep.subr.mxu0 0.0
        %1516 = vmatpush1.msra.mxu0 0.0
        %1517 = vmatprep.subr.mxu0 0.0
        %1518 = vmatpush1.msra.mxu0 0.0
        %1519 = vmatprep.subr.mxu0 0.0
        %1520 = vmatpush1.msra.mxu0 0.0
        %1521 = vmatprep.subr.mxu0 0.0
        %1522 = vmatpush1.msra.mxu0 0.0
        %1523 = vmatprep.subr.mxu0 0.0
        %1524 = vmatpush1.msra.mxu0 0.0
        %1525 = vmatprep.subr.mxu0 0.0
        %1526 = vmatpush1.msra.mxu0 0.0
        %1527 = vmatprep.subr.mxu0 0.0
        %1528 = vmatpush1.msra.mxu0 0.0
        %1529 = vmatprep.subr.mxu0 0.0
        %1530 = vmatpush1.msra.mxu0 0.0
        %1531 = vmatprep.subr.mxu0 0.0
        %1532 = vmatpush1.msra.mxu0 0.0
        %1533 = vmatprep.subr.mxu0 0.0
        %1534 = vmatpush1.msra.mxu0 0.0
        %1535 = vmatprep.subr.mxu0 0.0
        %1536 = vmatpush1.msra.mxu0 0.0
        %1537 = vmatprep.subr.mxu0 0.0
        %1538 = vmatpush1.msra.mxu0 0.0
        %1539 = vmatprep.subr.mxu0 0.0
        %1540 = vmatpush1.msra.mxu0 0.0
        %1541 = vmatprep.subr.mxu0 0.0
        %1542 = vmatpush1.msra.mxu0 0.0
        %1543 = vmatprep.subr.mxu0 0.0
        %1544 = vmatpush1.msra.mxu0 0.0
        %1545 = vmatprep.subr.mxu0 0.0
        %1546 = vmatpush1.msra.mxu0 0.0
        %1547 = vmatprep.subr.mxu0 0.0
        %1548 = vmatpush1.msra.mxu0 0.0
        %1549 = vmatprep.subr.mxu0 0.0
        %1550 = vmatpush1.msra.mxu0 0.0
        %1551 = vmatprep.subr.mxu0 0.0
        %1552 = vmatpush1.msra.mxu0 0.0
        %1553 = vmatprep.subr.mxu0 0.0
        %1554 = vmatpush1.msra.mxu0 0.0
        %1555 = vmatprep.subr.mxu0 0.0
        %1556 = vmatpush1.msra.mxu0 0.0
        %1557 = vmatprep.subr.mxu0 0.0
        %1558 = vmatpush1.msra.mxu0 0.0
        %1559 = vmatprep.subr.mxu0 0.0
        %1560 = vmatpush1.msra.mxu0 0.0
        %1561 = vmatprep.subr.mxu0 0.0
        %1562 = vmatpush1.msra.mxu0 0.0
        %1563 = vmatprep.subr.mxu0 0.0
        %1564 = vmatpush1.msra.mxu0 0.0
        %1565 = vmatprep.subr.mxu0 0.0
        %1566 = vmatpush1.msra.mxu0 0.0
        %1567 = vmatprep.mubr.f32.mxu0 0.0
        %1568 = vmatmul.mubr.f32.gmra.mrb[0].mxu0 %v1495
        %v1569 = vpop.f32.mrb[0].mxu0
        %v1570 = vadd.f32 %v1482, %v1569
        %v1571 = vpop.f32.mrb[0].mxu0
        %v1572 = vadd.f32 %v1482, %v1571
        %1573 = vmatprep.mubr.f32.mxu0 0.0
        %1574 = vmatmul.mubr.f32.gmra.mrb[0].mxu0 %v1498
        %v1575 = vpop.f32.mrb[0].mxu0
        %v1576 = vadd.f32 %v1487, %v1575
        %v1577 = vpop.f32.mrb[0].mxu0
        %v1578 = vadd.f32 %v1487, %v1577
        %1579 = vmatprep.mubr.f32.mxu0 0.0
        %1580 = vmatmul.mubr.f32.gmra.mrb[0].mxu0 %v1501
        %v1581 = vpop.f32.mrb[0].mxu0
        %v1582 = vadd.f32 %v1492, %v1581
        %v1583 = vpop.f32.mrb[0].mxu0
        %v1584 = vadd.f32 %v1492, %v1583
        %1585 = vdwg.mxu0
        %1586 = vmatprep.subr.mxu0 %v1456
        %1587 = vmatpush1.msra.mxu0 %v1455
        %1588 = vmatprep.subr.mxu0 %v1460
        %1589 = vmatpush1.msra.mxu0 %v1459
        %1590 = vmatprep.subr.mxu0 %v1464
        %1591 = vmatpush1.msra.mxu0 %v1463
        %1592 = vmatprep.subr.mxu0 %v1468
        %1593 = vmatpush1.msra.mxu0 %v1467
        %1594 = vmatprep.subr.mxu0 %v1472
        %1595 = vmatpush1.msra.mxu0 %v1471
        %1596 = vmatprep.subr.mxu0 0.0
        %1597 = vmatpush1.msra.mxu0 0.0
        %1598 = vmatprep.subr.mxu0 0.0
        %1599 = vmatpush1.msra.mxu0 0.0
        %1600 = vmatprep.subr.mxu0 0.0
        %1601 = vmatpush1.msra.mxu0 0.0
        %1602 = vmatprep.subr.mxu0 0.0
        %1603 = vmatpush1.msra.mxu0 0.0
        %1604 = vmatprep.subr.mxu0 0.0
        %1605 = vmatpush1.msra.mxu0 0.0
        %1606 = vmatprep.subr.mxu0 0.0
        %1607 = vmatpush1.msra.mxu0 0.0
        %1608 = vmatprep.subr.mxu0 0.0
        %1609 = vmatpush1.msra.mxu0 0.0
        %1610 = vmatprep.subr.mxu0 0.0
        %1611 = vmatpush1.msra.mxu0 0.0
        %1612 = vmatprep.subr.mxu0 0.0
        %1613 = vmatpush1.msra.mxu0 0.0
        %1614 = vmatprep.subr.mxu0 0.0
        %1615 = vmatpush1.msra.mxu0 0.0
        %1616 = vmatprep.subr.mxu0 0.0
        %1617 = vmatpush1.msra.mxu0 0.0
        %1618 = vmatprep.subr.mxu0 0.0
        %1619 = vmatpush1.msra.mxu0 0.0
        %1620 = vmatprep.subr.mxu0 0.0
        %1621 = vmatpush1.msra.mxu0 0.0
        %1622 = vmatprep.subr.mxu0 0.0
        %1623 = vmatpush1.msra.mxu0 0.0
        %1624 = vmatprep.subr.mxu0 0.0
        %1625 = vmatpush1.msra.mxu0 0.0
        %1626 = vmatprep.subr.mxu0 0.0
        %1627 = vmatpush1.msra.mxu0 0.0
        %1628 = vmatprep.subr.mxu0 0.0
        %1629 = vmatpush1.msra.mxu0 0.0
        %1630 = vmatprep.subr.mxu0 0.0
        %1631 = vmatpush1.msra.mxu0 0.0
        %1632 = vmatprep.subr.mxu0 0.0
        %1633 = vmatpush1.msra.mxu0 0.0
        %1634 = vmatprep.subr.mxu0 0.0
        %1635 = vmatpush1.msra.mxu0 0.0
        %1636 = vmatprep.subr.mxu0 0.0
        %1637 = vmatpush1.msra.mxu0 0.0
        %1638 = vmatprep.subr.mxu0 0.0
        %1639 = vmatpush1.msra.mxu0 0.0
        %1640 = vmatprep.subr.mxu0 0.0
        %1641 = vmatpush1.msra.mxu0 0.0
        %1642 = vmatprep.subr.mxu0 0.0
        %1643 = vmatpush1.msra.mxu0 0.0
        %1644 = vmatprep.subr.mxu0 0.0
        %1645 = vmatpush1.msra.mxu0 0.0
        %1646 = vmatprep.subr.mxu0 0.0
        %1647 = vmatpush1.msra.mxu0 0.0
        %1648 = vmatprep.subr.mxu0 0.0
        %1649 = vmatpush1.msra.mxu0 0.0
        %1650 = vmatprep.mubr.f32.mxu0 0.0
        %1651 = vmatmul.mubr.f32.gmra.mrb[0].mxu0 %v1495
        %v1652 = vpop.f32.mrb[0].mxu0
        %v1653 = vadd.f32 %v1482, %v1652
        %v1654 = vpop.f32.mrb[0].mxu0
        %v1655 = vadd.f32 %v1482, %v1654
        %1656 = vmatprep.mubr.f32.mxu0 0.0
        %1657 = vmatmul.mubr.f32.gmra.mrb[0].mxu0 %v1498
        %v1658 = vpop.f32.mrb[0].mxu0
        %v1659 = vadd.f32 %v1487, %v1658
        %v1660 = vpop.f32.mrb[0].mxu0
        %v1661 = vadd.f32 %v1487, %v1660
        %1662 = vmatprep.mubr.f32.mxu0 0.0
        %1663 = vmatmul.mubr.f32.gmra.mrb[0].mxu0 %v1501
        %v1664 = vpop.f32.mrb[0].mxu0
        %v1665 = vadd.f32 %v1492, %v1664
        %v1666 = vpop.f32.mrb[0].mxu0
        %v1667 = vadd.f32 %v1492, %v1666
        %1668 = vdwg.mxu0
        %v1669 = vtanh.pop %v1570
        %v1670 = vtanh.pop %v1572
        %v1671 = vtanh.pop %v1653
        %v1672 = vtanh.pop %v1655
        %v1673 = vtanh.pop %v1576
        %v1674 = vtanh.pop %v1578
        %v1675 = vtanh.pop %v1659
        %v1676 = vtanh.pop %v1661
        %v1677 = vtanh.pop %v1582
        %v1678 = vtanh.pop %v1584
        %v1679 = vtanh.pop %v1665
        %v1680 = vtanh.pop %v1667
        %v1681 = vld [vmem:[%s9] sm:$0xff]
        %v1682 = vld [vmem:[%s9 + $0x8] sm:$0xff]
        %v1683 = vld [vmem:[%s9 + $0x10] sm:$0xf]
        %v1684 = vld [vmem:[%s10] sm:$0xff]
        %v1685 = vld [vmem:[%s10 + $0x8] sm:$0xff]
        %v1686 = vld [vmem:[%s10 + $0x10] sm:$0xf]
        %1688 = vset.pattern.permute.xlu0 0
        %1689 = vperm.xlu0 %1688, %v1684
        %v1690 = vpop.permute.xlu0 %1689
        %1693 = vset.pattern.permute.xlu0 0
        %1694 = vperm.xlu0 %1693, %v1685
        %v1695 = vpop.permute.xlu0 %1694
        %1698 = vset.pattern.permute.xlu0 0
        %1699 = vperm.xlu0 %1698, %v1686
        %v1700 = vpop.permute.xlu0 %1699
        %vm1702 = vcmask 162816
        %v1704 = vsel %vm1702, %v1681, 0
        %v1707 = vsel %vm1702, %v1682, 0
        %v1710 = vsel %vm1702, %v1683, 0
        %v1713 = vsel %vm989, %v1677, 0
        %v1716 = vsel %vm989, %v1678, 0
        %v1719 = vsel %vm989, %v1679, 0
        %v1722 = vsel %vm989, %v1680, 0
        %1724 = vmatprep.subr.mxu0 %v1670
        %1725 = vmatpush1.msra.mxu0 %v1669
        %1726 = vmatprep.subr.mxu0 %v1674
        %1727 = vmatpush1.msra.mxu0 %v1673
        %1728 = vmatprep.subr.mxu0 %v1716
        %1729 = vmatpush1.msra.mxu0 %v1713
        %1730 = vmatprep.subr.mxu0 0.0
        %1731 = vmatpush1.msra.mxu0 0.0
        %1732 = vmatprep.subr.mxu0 0.0
        %1733 = vmatpush1.msra.mxu0 0.0
        %1734 = vmatprep.subr.mxu0 0.0
        %1735 = vmatpush1.msra.mxu0 0.0
        %1736 = vmatprep.subr.mxu0 0.0
        %1737 = vmatpush1.msra.mxu0 0.0
        %1738 = vmatprep.subr.mxu0 0.0
        %1739 = vmatpush1.msra.mxu0 0.0
        %1740 = vmatprep.subr.mxu0 0.0
        %1741 = vmatpush1.msra.mxu0 0.0
        %1742 = vmatprep.subr.mxu0 0.0
        %1743 = vmatpush1.msra.mxu0 0.0
        %1744 = vmatprep.subr.mxu0 0.0
        %1745 = vmatpush1.msra.mxu0 0.0
        %1746 = vmatprep.subr.mxu0 0.0
        %1747 = vmatpush1.msra.mxu0 0.0
        %1748 = vmatprep.subr.mxu0 0.0
        %1749 = vmatpush1.msra.mxu0 0.0
        %1750 = vmatprep.subr.mxu0 0.0
        %1751 = vmatpush1.msra.mxu0 0.0
        %1752 = vmatprep.subr.mxu0 0.0
        %1753 = vmatpush1.msra.mxu0 0.0
        %1754 = vmatprep.subr.mxu0 0.0
        %1755 = vmatpush1.msra.mxu0 0.0
        %1756 = vmatprep.subr.mxu0 0.0
        %1757 = vmatpush1.msra.mxu0 0.0
        %1758 = vmatprep.subr.mxu0 0.0
        %1759 = vmatpush1.msra.mxu0 0.0
        %1760 = vmatprep.subr.mxu0 0.0
        %1761 = vmatpush1.msra.mxu0 0.0
        %1762 = vmatprep.subr.mxu0 0.0
        %1763 = vmatpush1.msra.mxu0 0.0
        %1764 = vmatprep.subr.mxu0 0.0
        %1765 = vmatpush1.msra.mxu0 0.0
        %1766 = vmatprep.subr.mxu0 0.0
        %1767 = vmatpush1.msra.mxu0 0.0
        %1768 = vmatprep.subr.mxu0 0.0
        %1769 = vmatpush1.msra.mxu0 0.0
        %1770 = vmatprep.subr.mxu0 0.0
        %1771 = vmatpush1.msra.mxu0 0.0
        %1772 = vmatprep.subr.mxu0 0.0
        %1773 = vmatpush1.msra.mxu0 0.0
        %1774 = vmatprep.subr.mxu0 0.0
        %1775 = vmatpush1.msra.mxu0 0.0
        %1776 = vmatprep.subr.mxu0 0.0
        %1777 = vmatpush1.msra.mxu0 0.0
        %1778 = vmatprep.subr.mxu0 0.0
        %1779 = vmatpush1.msra.mxu0 0.0
        %1780 = vmatprep.subr.mxu0 0.0
        %1781 = vmatpush1.msra.mxu0 0.0
        %1782 = vmatprep.subr.mxu0 0.0
        %1783 = vmatpush1.msra.mxu0 0.0
        %1784 = vmatprep.subr.mxu0 0.0
        %1785 = vmatpush1.msra.mxu0 0.0
        %1786 = vmatprep.subr.mxu0 0.0
        %1787 = vmatpush1.msra.mxu0 0.0
        %1788 = vmatprep.mubr.f32.mxu0 0.0
        %1789 = vmatmul.mubr.f32.gmra.mrb[0].mxu0 %v1704
        %v1790 = vpop.f32.mrb[0].mxu0
        %v1791 = vadd.f32 %v1690, %v1790
        %v1792 = vpop.f32.mrb[0].mxu0
        %v1793 = vadd.f32 %v1690, %v1792
        %1794 = vmatprep.mubr.f32.mxu0 0.0
        %1795 = vmatmul.mubr.f32.gmra.mrb[0].mxu0 %v1707
        %v1796 = vpop.f32.mrb[0].mxu0
        %v1797 = vadd.f32 %v1695, %v1796
        %v1798 = vpop.f32.mrb[0].mxu0
        %v1799 = vadd.f32 %v1695, %v1798
        %1800 = vmatprep.mubr.f32.mxu0 0.0
        %1801 = vmatmul.mubr.f32.gmra.mrb[0].mxu0 %v1710
        %v1802 = vpop.f32.mrb[0].mxu0
        %v1803 = vadd.f32 %v1700, %v1802
        %v1804 = vpop.f32.mrb[0].mxu0
        %v1805 = vadd.f32 %v1700, %v1804
        %1806 = vdwg.mxu0
        %1807 = vmatprep.subr.mxu0 %v1672
        %1808 = vmatpush1.msra.mxu0 %v1671
        %1809 = vmatprep.subr.mxu0 %v1676
        %1810 = vmatpush1.msra.mxu0 %v1675
        %1811 = vmatprep.subr.mxu0 %v1722
        %1812 = vmatpush1.msra.mxu0 %v1719
        %1813 = vmatprep.subr.mxu0 0.0
        %1814 = vmatpush1.msra.mxu0 0.0
        %1815 = vmatprep.subr.mxu0 0.0
        %1816 = vmatpush1.msra.mxu0 0.0
        %1817 = vmatprep.subr.mxu0 0.0
        %1818 = vmatpush1.msra.mxu0 0.0
        %1819 = vmatprep.subr.mxu0 0.0
        %1820 = vmatpush1.msra.mxu0 0.0
        %1821 = vmatprep.subr.mxu0 0.0
        %1822 = vmatpush1.msra.mxu0 0.0
        %1823 = vmatprep.subr.mxu0 0.0
        %1824 = vmatpush1.msra.mxu0 0.0
        %1825 = vmatprep.subr.mxu0 0.0
        %1826 = vmatpush1.msra.mxu0 0.0
        %1827 = vmatprep.subr.mxu0 0.0
        %1828 = vmatpush1.msra.mxu0 0.0
        %1829 = vmatprep.subr.mxu0 0.0
        %1830 = vmatpush1.msra.mxu0 0.0
        %1831 = vmatprep.subr.mxu0 0.0
        %1832 = vmatpush1.msra.mxu0 0.0
        %1833 = vmatprep.subr.mxu0 0.0
        %1834 = vmatpush1.msra.mxu0 0.0
        %1835 = vmatprep.subr.mxu0 0.0
        %1836 = vmatpush1.msra.mxu0 0.0
        %1837 = vmatprep.subr.mxu0 0.0
        %1838 = vmatpush1.msra.mxu0 0.0
        %1839 = vmatprep.subr.mxu0 0.0
        %1840 = vmatpush1.msra.mxu0 0.0
        %1841 = vmatprep.subr.mxu0 0.0
        %1842 = vmatpush1.msra.mxu0 0.0
        %1843 = vmatprep.subr.mxu0 0.0
        %1844 = vmatpush1.msra.mxu0 0.0
        %1845 = vmatprep.subr.mxu0 0.0
        %1846 = vmatpush1.msra.mxu0 0.0
        %1847 = vmatprep.subr.mxu0 0.0
        %1848 = vmatpush1.msra.mxu0 0.0
        %1849 = vmatprep.subr.mxu0 0.0
        %1850 = vmatpush1.msra.mxu0 0.0
        %1851 = vmatprep.subr.mxu0 0.0
        %1852 = vmatpush1.msra.mxu0 0.0
        %1853 = vmatprep.subr.mxu0 0.0
        %1854 = vmatpush1.msra.mxu0 0.0
        %1855 = vmatprep.subr.mxu0 0.0
        %1856 = vmatpush1.msra.mxu0 0.0
        %1857 = vmatprep.subr.mxu0 0.0
        %1858 = vmatpush1.msra.mxu0 0.0
        %1859 = vmatprep.subr.mxu0 0.0
        %1860 = vmatpush1.msra.mxu0 0.0
        %1861 = vmatprep.subr.mxu0 0.0
        %1862 = vmatpush1.msra.mxu0 0.0
        %1863 = vmatprep.subr.mxu0 0.0
        %1864 = vmatpush1.msra.mxu0 0.0
        %1865 = vmatprep.subr.mxu0 0.0
        %1866 = vmatpush1.msra.mxu0 0.0
        %1867 = vmatprep.subr.mxu0 0.0
        %1868 = vmatpush1.msra.mxu0 0.0
        %1869 = vmatprep.subr.mxu0 0.0
        %1870 = vmatpush1.msra.mxu0 0.0
        %1871 = vmatprep.mubr.f32.mxu0 0.0
        %1872 = vmatmul.mubr.f32.gmra.mrb[0].mxu0 %v1704
        %v1873 = vpop.f32.mrb[0].mxu0
        %v1874 = vadd.f32 %v1690, %v1873
        %v1875 = vpop.f32.mrb[0].mxu0
        %v1876 = vadd.f32 %v1690, %v1875
        %1877 = vmatprep.mubr.f32.mxu0 0.0
        %1878 = vmatmul.mubr.f32.gmra.mrb[0].mxu0 %v1707
        %v1879 = vpop.f32.mrb[0].mxu0
        %v1880 = vadd.f32 %v1695, %v1879
        %v1881 = vpop.f32.mrb[0].mxu0
        %v1882 = vadd.f32 %v1695, %v1881
        %1883 = vmatprep.mubr.f32.mxu0 0.0
        %1884 = vmatmul.mubr.f32.gmra.mrb[0].mxu0 %v1710
        %v1885 = vpop.f32.mrb[0].mxu0
        %v1886 = vadd.f32 %v1700, %v1885
        %v1887 = vpop.f32.mrb[0].mxu0
        %v1888 = vadd.f32 %v1700, %v1887
        %1889 = vdwg.mxu0
        %v1890 = vtanh.pop %v1791
        %v1891 = vtanh.pop %v1793
        %v1892 = vtanh.pop %v1874
        %v1893 = vtanh.pop %v1876
        %v1894 = vtanh.pop %v1797
        %v1895 = vtanh.pop %v1799
        %v1896 = vtanh.pop %v1880
        %v1897 = vtanh.pop %v1882
        %v1898 = vtanh.pop %v1803
        %v1899 = vtanh.pop %v1805
        %v1900 = vtanh.pop %v1886
        %v1901 = vtanh.pop %v1888
        %v1902 = vld [vmem:[%s11] sm:$0x7]
        %v1903 = vld [vmem:[%s12] sm:$0x7]
        %1905 = vset.pattern.permute.xlu0 0
        %1906 = vperm.xlu0 %1905, %v1903
        %v1907 = vpop.permute.xlu0 %1906
        %v1910 = vsel %vm1702, %v1902, 0
        %v1913 = vsel %vm989, %v1898, 0
        %v1916 = vsel %vm989, %v1899, 0
        %v1919 = vsel %vm989, %v1900, 0
        %v1922 = vsel %vm989, %v1901, 0
        %1924 = vmatprep.subr.mxu0 %v1891
        %1925 = vmatpush1.msra.mxu0 %v1890
        %1926 = vmatprep.subr.mxu0 %v1895
        %1927 = vmatpush1.msra.mxu0 %v1894
        %1928 = vmatprep.subr.mxu0 %v1916
        %1929 = vmatpush1.msra.mxu0 %v1913
        %1930 = vmatprep.subr.mxu0 0.0
        %1931 = vmatpush1.msra.mxu0 0.0
        %1932 = vmatprep.subr.mxu0 0.0
        %1933 = vmatpush1.msra.mxu0 0.0
        %1934 = vmatprep.subr.mxu0 0.0
        %1935 = vmatpush1.msra.mxu0 0.0
        %1936 = vmatprep.subr.mxu0 0.0
        %1937 = vmatpush1.msra.mxu0 0.0
        %1938 = vmatprep.subr.mxu0 0.0
        %1939 = vmatpush1.msra.mxu0 0.0
        %1940 = vmatprep.subr.mxu0 0.0
        %1941 = vmatpush1.msra.mxu0 0.0
        %1942 = vmatprep.subr.mxu0 0.0
        %1943 = vmatpush1.msra.mxu0 0.0
        %1944 = vmatprep.subr.mxu0 0.0
        %1945 = vmatpush1.msra.mxu0 0.0
        %1946 = vmatprep.subr.mxu0 0.0
        %1947 = vmatpush1.msra.mxu0 0.0
        %1948 = vmatprep.subr.mxu0 0.0
        %1949 = vmatpush1.msra.mxu0 0.0
        %1950 = vmatprep.subr.mxu0 0.0
        %1951 = vmatpush1.msra.mxu0 0.0
        %1952 = vmatprep.subr.mxu0 0.0
        %1953 = vmatpush1.msra.mxu0 0.0
        %1954 = vmatprep.subr.mxu0 0.0
        %1955 = vmatpush1.msra.mxu0 0.0
        %1956 = vmatprep.subr.mxu0 0.0
        %1957 = vmatpush1.msra.mxu0 0.0
        %1958 = vmatprep.subr.mxu0 0.0
        %1959 = vmatpush1.msra.mxu0 0.0
        %1960 = vmatprep.subr.mxu0 0.0
        %1961 = vmatpush1.msra.mxu0 0.0
        %1962 = vmatprep.subr.mxu0 0.0
        %1963 = vmatpush1.msra.mxu0 0.0
        %1964 = vmatprep.subr.mxu0 0.0
        %1965 = vmatpush1.msra.mxu0 0.0
        %1966 = vmatprep.subr.mxu0 0.0
        %1967 = vmatpush1.msra.mxu0 0.0
        %1968 = vmatprep.subr.mxu0 0.0
        %1969 = vmatpush1.msra.mxu0 0.0
        %1970 = vmatprep.subr.mxu0 0.0
        %1971 = vmatpush1.msra.mxu0 0.0
        %1972 = vmatprep.subr.mxu0 0.0
        %1973 = vmatpush1.msra.mxu0 0.0
        %1974 = vmatprep.subr.mxu0 0.0
        %1975 = vmatpush1.msra.mxu0 0.0
        %1976 = vmatprep.subr.mxu0 0.0
        %1977 = vmatpush1.msra.mxu0 0.0
        %1978 = vmatprep.subr.mxu0 0.0
        %1979 = vmatpush1.msra.mxu0 0.0
        %1980 = vmatprep.subr.mxu0 0.0
        %1981 = vmatpush1.msra.mxu0 0.0
        %1982 = vmatprep.subr.mxu0 0.0
        %1983 = vmatpush1.msra.mxu0 0.0
        %1984 = vmatprep.subr.mxu0 0.0
        %1985 = vmatpush1.msra.mxu0 0.0
        %1986 = vmatprep.subr.mxu0 0.0
        %1987 = vmatpush1.msra.mxu0 0.0
        %1988 = vmatprep.mubr.f32.mxu0 0.0
        %1989 = vmatmul.mubr.f32.gmra.mrb[0].mxu0 %v1910
        %v1990 = vpop.f32.mrb[0].mxu0
        %v1991 = vadd.f32 %v1907, %v1990
        %v1992 = vpop.f32.mrb[0].mxu0
        %v1993 = vadd.f32 %v1907, %v1992
        %1994 = vdwg.mxu0
        %1995 = vmatprep.subr.mxu0 %v1893
        %1996 = vmatpush1.msra.mxu0 %v1892
        %1997 = vmatprep.subr.mxu0 %v1897
        %1998 = vmatpush1.msra.mxu0 %v1896
        %1999 = vmatprep.subr.mxu0 %v1922
        %2000 = vmatpush1.msra.mxu0 %v1919
        %2001 = vmatprep.subr.mxu0 0.0
        %2002 = vmatpush1.msra.mxu0 0.0
        %2003 = vmatprep.subr.mxu0 0.0
        %2004 = vmatpush1.msra.mxu0 0.0
        %2005 = vmatprep.subr.mxu0 0.0
        %2006 = vmatpush1.msra.mxu0 0.0
        %2007 = vmatprep.subr.mxu0 0.0
        %2008 = vmatpush1.msra.mxu0 0.0
        %2009 = vmatprep.subr.mxu0 0.0
        %2010 = vmatpush1.msra.mxu0 0.0
        %2011 = vmatprep.subr.mxu0 0.0
        %2012 = vmatpush1.msra.mxu0 0.0
        %2013 = vmatprep.subr.mxu0 0.0
        %2014 = vmatpush1.msra.mxu0 0.0
        %2015 = vmatprep.subr.mxu0 0.0
        %2016 = vmatpush1.msra.mxu0 0.0
        %2017 = vmatprep.subr.mxu0 0.0
        %2018 = vmatpush1.msra.mxu0 0.0
        %2019 = vmatprep.subr.mxu0 0.0
        %2020 = vmatpush1.msra.mxu0 0.0
        %2021 = vmatprep.subr.mxu0 0.0
        %2022 = vmatpush1.msra.mxu0 0.0
        %2023 = vmatprep.subr.mxu0 0.0
        %2024 = vmatpush1.msra.mxu0 0.0
        %2025 = vmatprep.subr.mxu0 0.0
        %2026 = vmatpush1.msra.mxu0 0.0
        %2027 = vmatprep.subr.mxu0 0.0
        %2028 = vmatpush1.msra.mxu0 0.0
        %2029 = vmatprep.subr.mxu0 0.0
        %2030 = vmatpush1.msra.mxu0 0.0
        %2031 = vmatprep.subr.mxu0 0.0
        %2032 = vmatpush1.msra.mxu0 0.0
        %2033 = vmatprep.subr.mxu0 0.0
        %2034 = vmatpush1.msra.mxu0 0.0
        %2035 = vmatprep.subr.mxu0 0.0
        %2036 = vmatpush1.msra.mxu0 0.0
        %2037 = vmatprep.subr.mxu0 0.0
        %2038 = vmatpush1.msra.mxu0 0.0
        %2039 = vmatprep.subr.mxu0 0.0
        %2040 = vmatpush1.msra.mxu0 0.0
        %2041 = vmatprep.subr.mxu0 0.0
        %2042 = vmatpush1.msra.mxu0 0.0
        %2043 = vmatprep.subr.mxu0 0.0
        %2044 = vmatpush1.msra.mxu0 0.0
        %2045 = vmatprep.subr.mxu0 0.0
        %2046 = vmatpush1.msra.mxu0 0.0
        %2047 = vmatprep.subr.mxu0 0.0
        %2048 = vmatpush1.msra.mxu0 0.0
        %2049 = vmatprep.subr.mxu0 0.0
        %2050 = vmatpush1.msra.mxu0 0.0
        %2051 = vmatprep.subr.mxu0 0.0
        %2052 = vmatpush1.msra.mxu0 0.0
        %2053 = vmatprep.subr.mxu0 0.0
        %2054 = vmatpush1.msra.mxu0 0.0
        %2055 = vmatprep.subr.mxu0 0.0
        %2056 = vmatpush1.msra.mxu0 0.0
        %2057 = vmatprep.subr.mxu0 0.0
        %2058 = vmatpush1.msra.mxu0 0.0
        %2059 = vmatprep.mubr.f32.mxu0 0.0
        %2060 = vmatmul.mubr.f32.gmra.mrb[0].mxu0 %v1910
        %v2061 = vpop.f32.mrb[0].mxu0
        %v2062 = vadd.f32 %v1907, %v2061
        %v2063 = vpop.f32.mrb[0].mxu0
        %v2064 = vadd.f32 %v1907, %v2063
        %2065 = vdwg.mxu0
        %v2070 = vcombine.low %v1991, %v1993
        %v2071 = vcombine.low %v2062, %v2064
        %2074 = vst [vmem:[%s434] sm:$0x77] %v2070
        %2075 = vst [vmem:[%s434 + $0x8] sm:$0x77] %v2071
        %s2076 = sand.u32 %s313, 1
        %s2077 = scalar_lea.sflag [#allocation3], %s2076
        %s2078 = sand.u32 %s313, 1
        %s2079 = smul.addr %s2078, 16
        %s2080 = scalar_lea.vmem [#allocation2], %s2079
        // Predicated region
        $region73: #{dnn_forward.1} parent=71 // pred_check
          %p2081 = pneg %p323
        $region74: #{dnn_forward.1} parent=71 // pred_check_branch
          %2083 = sbr.rel (%p2081) target = $region76
        $region75: #{dnn_forward.1} parent=71 // pred_region
          %s2084 = smul.u32 4, %s27
          %s2086 = ssub.s32 256, 256
          %2087 = vsyncadd %s2077, %s2086
          %s2088 = smul.addr %s2084, 64
          %s2089 = scalar_lea.hbm %s13, %s2088
          %s2091 = sshll.u32 %s2080, 4
          %s2092 = int_to_ptr.vmem [resolvable:$true] %s2091
          %2094 = dma.vmem_to_hbm [thread:$0]  %s2092, 256, %s2089, %s2077
        $region76: #{dnn_forward.1} parent=71 // pred_fallthru
          _
      $region72: #{dnn_forward.1} parent=5 // pred_fallthru
        _
      %p2095 = scmp.le.s32.totalorder 2, %s22
      // Predicated region
      $region77: #{dnn_forward.1} parent=5 // pred_check
        %p2096 = pneg %p2095
      $region78: #{dnn_forward.1} parent=5 // pred_check_branch
        %2098 = sbr.rel (%p2096) target = $region80
      $region79: #{dnn_forward.1} parent=5 // pred_region
        %s2099 = ssub.s32 %s22, 2
        // Predicated region
        $region81: #{dnn_forward.1} parent=79 // pred_check
          %p2100 = pneg %p329
        $region82: #{dnn_forward.1} parent=79 // pred_check_branch
          %2102 = sbr.rel (%p2100) target = $region84
        $region83: #{dnn_forward.1} parent=79 // pred_region
          %s2103 = sand.u32 %s314, 1
          %s2104 = scalar_lea.sflag [#allocation3], %s2103
          %s2105 = sand.u32 %s314, 1
          %s2106 = smul.addr %s2105, 16
          %s2107 = scalar_lea.vmem [#allocation2], %s2106
          %2108 = dma.done %s2104, 256
        $region84: #{dnn_forward.1} parent=79 // pred_fallthru
          _
      $region80: #{dnn_forward.1} parent=5 // pred_fallthru
        _
    $region6: #{dnn_forward.1} parent=1 // loop_footer
      %s26 = sadd.s32 1, %s22
    $region7: #{dnn_forward.1} parent=1 // loop_footer_branch
      %21 = sbr.rel target = $region3
    $region8: #{dnn_forward.1} parent=1 // loop_exit
      _
    %2109 = vsyncpa [#allocation3], 1
    %s2110 = scalar_lea.sflag [#allocation3], 1
    %2111 = vsyncpa %s2110, 1

</llo_original>
